<compile_context>
chip_gen: v5e
topology: v5e:2x2
jax: 0.10.0
libtpu: 0.0.40
codegen_flags: <defaults>
</compile_context>

<pallas_src>
import math
from functools import partial

import jax
import jax.numpy as jnp
from jax.experimental import pallas as pl
from jax.experimental.pallas import tpu as pltpu


# ----------------------------------------------------------------------------
# Parameter construction (mirrors AE.__init__ layer structure)
# ----------------------------------------------------------------------------
def ae_layer_plan(layers):
    """Return list of (in_dim, out_dim, activation) mirroring the PyTorch AE."""
    plan = []
    # encoder: Linear + ReLU for all but last, then plain Linear
    for i in range(len(layers) - 2):
        plan.append((layers[i], layers[i + 1], "relu"))
    plan.append((layers[-2], layers[-1], "none"))
    # decoder: Linear + ReLU going back up, then Linear(layers[1], layers[0]) + Tanh
    for i in range(len(layers) - 1, 1, -1):
        plan.append((layers[i], layers[i - 1], "relu"))
    plan.append((layers[1], layers[0], "tanh"))
    return plan


def init_params(key, plan, dtype=jnp.float32):
    """nn.Linear-style init; weights PyTorch-native (out, in), bias (out, 1)."""
    params = []
    for (din, dout, _act) in plan:
        key, kw, kb = jax.random.split(key, 3)
        bound = 1.0 / math.sqrt(din)
        w = jax.random.uniform(kw, (dout, din), dtype, minval=-bound, maxval=bound)
        b = jax.random.uniform(kb, (dout, 1), dtype, minval=-bound, maxval=bound)
        params.append((w, b))
    return params


def prepare_params(params):
    """One-time pre-cast: weights -> bf16 (MXU operand dtype), biases -> f32."""
    return [(w.astype(jnp.bfloat16), b.astype(jnp.float32)) for (w, b) in params]


def _round_up(x, m):
    return ((x + m - 1) // m) * m


def _num_parallel_tiles():
    """1 tile on single-TensorCore chips (v5e/v6e); 2 on megacore chips (v4/v5p/v7x)."""
    try:
        kind = jax.devices()[0].device_kind.lower()
    except Exception:
        return 1
    if any(tag in kind for tag in ("v7", "7x", "v4", "v5p")):
        return 2
    return 1


# ----------------------------------------------------------------------------
# Pallas kernel: fused MLP (encoder + decoder), batch-on-lanes compute layout
# ----------------------------------------------------------------------------
def _ae_kernel(acts, x_ref, *rest):
    # rest = (w0, b0, w1, b1, ..., wN-1, bN-1, out_ref)
    out_ref = rest[-1]
    wb_refs = rest[:-1]

    # Native (bb, D0) tile -> (D0, bb): batch on the 128-lane axis, so every
    # intermediate is lane-dense and the bias broadcasts along lanes.
    h = x_ref[...].astype(jnp.float32).T

    for li, act in enumerate(acts):
        w = wb_refs[2 * li][...]            # (dout, din) bf16, VMEM-resident
        b = wb_refs[2 * li + 1][...]        # (dout, 1)   f32
        h = jnp.dot(
            w,
            h.astype(jnp.bfloat16),
            preferred_element_type=jnp.float32,
        ) + b
        if act == "relu":
            h = jnp.maximum(h, 0.0)
        elif act == "tanh":
            h = jnp.tanh(h)
        # "none": no activation

    # Back to native (bb, D_out) layout for the store (tiny XLU transpose).
    out_ref[...] = h.T.astype(out_ref.dtype)


def ae_forward(x, prepared_params, plan, *, block_batch=None, max_block_batch=8192):
    """x: (B, D0) row-major f32. Returns (B, D0) reconstruction, same layout."""
    B, D0 = x.shape
    assert D0 == plan[0][0]
    out_dim = plan[-1][1]  # final decoder output dim == layers[0]

    # Batch tile: one tile per TensorCore by default, multiple of 128 lanes,
    # capped so very large batches still use only a few grid steps.
    if block_batch is None:
        bb = _round_up(pl.cdiv(B, _num_parallel_tiles()), 128)
    else:
        bb = _round_up(block_batch, 128)
    bb = max(128, min(bb, _round_up(max_block_batch, 128), _round_up(B, 128)))
    grid = pl.cdiv(B, bb)  # tail tile (if any) is masked by Pallas; no pad/slice

    acts = tuple(act for (_, _, act) in plan)

    in_specs = [pl.BlockSpec((bb, D0), lambda i: (i, 0))]
    flat_params = []
    for (w, b) in prepared_params:
        dout, din = w.shape
        # Full-array blocks with constant index_map -> stay VMEM-resident.
        in_specs.append(pl.BlockSpec((dout, din), lambda i: (0, 0)))
        in_specs.append(pl.BlockSpec((dout, 1), lambda i: (0, 0)))
        flat_params.extend([w, b])

    out_spec = pl.BlockSpec((bb, out_dim), lambda i: (i, 0))

    return pl.pallas_call(
        partial(_ae_kernel, acts),
        out_shape=jax.ShapeDtypeStruct((B, out_dim), x.dtype),
        grid_spec=pltpu.PrefetchScalarGridSpec(
            num_scalar_prefetch=0,
            grid=(grid,),
            in_specs=in_specs,
            out_specs=out_spec,
        ),
        compiler_params=pltpu.CompilerParams(
            dimension_semantics=("parallel",),
        ),
    )(x, *flat_params)


# ----------------------------------------------------------------------------
# Pure-JAX reference (same bf16-operand / f32-accumulate math as the kernel)
# ----------------------------------------------------------------------------
def ae_forward_ref(x, prepared_params, plan):
    h = x.T.astype(jnp.float32)                            # (D0, B)
    for (w, b), (_, _, act) in zip(prepared_params, plan):
        h = jnp.dot(w, h.astype(jnp.bfloat16),
                    preferred_element_type=jnp.float32) + b
        if act == "relu":
            h = jnp.maximum(h, 0.0)
        elif act == "tanh":
            h = jnp.tanh(h)
    return h.T.astype(x.dtype)


if __name__ == "__main__":
    # AE(layers=[32, 16, 8]):
    #   encoder: Linear(32,16)+ReLU, Linear(16,8)
    #   decoder: Linear(8,16)+ReLU, Linear(16,32), Tanh
    layers = [32, 16, 8]
    plan = ae_layer_plan(layers)

    key = jax.random.PRNGKey(0)
    key, kx = jax.random.split(key)
    params = prepare_params(init_params(key, plan))

    # B=1024: one 1024-lane tile on single-TC chips (v5e/v6e), two 512-lane
    # parallel tiles on megacore chips (v7x) — chosen automatically.
    B = 1024
    x = jax.random.normal(kx, (B, layers[0]), jnp.float32)

    out = jax.block_until_ready(ae_forward(x, params, plan))
    ref = ae_forward_ref(x, params, plan)

    assert out.shape == (B, layers[0]), out.shape
    assert jnp.allclose(out, ref, atol=1e-3, rtol=1e-3), "mismatch vs reference"

    print("KERNEL_OK")
</pallas_src>

<mosaic_0001>
module attributes {stable_mosaic.version = 11 : i64} {
  func.func @_ae_kernel(%arg0: i32, %arg1: memref<1024x32xf32, #tpu.memory_space<vmem>>, %arg2: memref<16x32xbf16, #tpu.memory_space<vmem>>, %arg3: memref<16x1xf32, #tpu.memory_space<vmem>>, %arg4: memref<8x16xbf16, #tpu.memory_space<vmem>>, %arg5: memref<8x1xf32, #tpu.memory_space<vmem>>, %arg6: memref<16x8xbf16, #tpu.memory_space<vmem>>, %arg7: memref<16x1xf32, #tpu.memory_space<vmem>>, %arg8: memref<32x16xbf16, #tpu.memory_space<vmem>>, %arg9: memref<32x1xf32, #tpu.memory_space<vmem>>, %arg10: memref<1024x32xf32, #tpu.memory_space<vmem>>) attributes {dimension_semantics = [#tpu.dimension_semantics<parallel>], iteration_bounds = array<i64: 1>, scalar_prefetch = 0 : i64, scratch_operands = 0 : i64, tpu.core_type = #tpu.core_type<tc>, window_params = [{transform_indices = @transform_0, window_bounds = array<i64: 1024, 32>}, {pipeline_mode = #tpu.pipeline_mode<synchronous>, transform_indices = @transform_1, window_bounds = array<i64: 16, 32>}, {pipeline_mode = #tpu.pipeline_mode<synchronous>, transform_indices = @transform_2, window_bounds = array<i64: 16, 1>}, {pipeline_mode = #tpu.pipeline_mode<synchronous>, transform_indices = @transform_3, window_bounds = array<i64: 8, 16>}, {pipeline_mode = #tpu.pipeline_mode<synchronous>, transform_indices = @transform_4, window_bounds = array<i64: 8, 1>}, {pipeline_mode = #tpu.pipeline_mode<synchronous>, transform_indices = @transform_5, window_bounds = array<i64: 16, 8>}, {pipeline_mode = #tpu.pipeline_mode<synchronous>, transform_indices = @transform_6, window_bounds = array<i64: 16, 1>}, {pipeline_mode = #tpu.pipeline_mode<synchronous>, transform_indices = @transform_7, window_bounds = array<i64: 32, 16>}, {pipeline_mode = #tpu.pipeline_mode<synchronous>, transform_indices = @transform_8, window_bounds = array<i64: 32, 1>}, {transform_indices = @transform_9, window_bounds = array<i64: 1024, 32>}]} {
    %c0 = arith.constant 0 : index
    %c0_0 = arith.constant 0 : index
    %0 = vector.load %arg1[%c0, %c0_0] : memref<1024x32xf32, #tpu.memory_space<vmem>>, vector<1024x32xf32>
    %1 = tpu.transpose %0, [1, 0] : vector<1024x32xf32> -> vector<32x1024xf32>
    %c0_1 = arith.constant 0 : index
    %c0_2 = arith.constant 0 : index
    %2 = vector.load %arg2[%c0_1, %c0_2] : memref<16x32xbf16, #tpu.memory_space<vmem>>, vector<16x32xbf16>
    %c0_3 = arith.constant 0 : index
    %c0_4 = arith.constant 0 : index
    %3 = vector.load %arg3[%c0_3, %c0_4] : memref<16x1xf32, #tpu.memory_space<vmem>>, vector<16x1xf32>
    %4 = arith.truncf %1 : vector<32x1024xf32> to vector<32x1024xbf16>
    %cst = arith.constant dense<0.000000e+00> : vector<16x1024xf32>
    %5 = tpu.matmul %2, %4, %cst {dimension_numbers = #tpu.dot_dimension_numbers<[1], [0], [0], [1], [0, 0, 1, 1], [], []>} : vector<16x32xbf16>, vector<32x1024xbf16>, vector<16x1024xf32> -> vector<16x1024xf32>
    %6 = vector.broadcast %3 : vector<16x1xf32> to vector<16x1024xf32>
    %7 = arith.addf %5, %6 : vector<16x1024xf32>
    %cst_5 = arith.constant 0.000000e+00 : f32
    %8 = vector.broadcast %cst_5 : f32 to vector<16x1024xf32>
    %9 = arith.maximumf %7, %8 : vector<16x1024xf32>
    %c0_6 = arith.constant 0 : index
    %c0_7 = arith.constant 0 : index
    %10 = vector.load %arg4[%c0_6, %c0_7] : memref<8x16xbf16, #tpu.memory_space<vmem>>, vector<8x16xbf16>
    %c0_8 = arith.constant 0 : index
    %c0_9 = arith.constant 0 : index
    %11 = vector.load %arg5[%c0_8, %c0_9] : memref<8x1xf32, #tpu.memory_space<vmem>>, vector<8x1xf32>
    %12 = arith.truncf %9 : vector<16x1024xf32> to vector<16x1024xbf16>
    %cst_10 = arith.constant dense<0.000000e+00> : vector<8x1024xf32>
    %13 = tpu.matmul %10, %12, %cst_10 {dimension_numbers = #tpu.dot_dimension_numbers<[1], [0], [0], [1], [0, 0, 1, 1], [], []>} : vector<8x16xbf16>, vector<16x1024xbf16>, vector<8x1024xf32> -> vector<8x1024xf32>
    %14 = vector.broadcast %11 : vector<8x1xf32> to vector<8x1024xf32>
    %15 = arith.addf %13, %14 : vector<8x1024xf32>
    %c0_11 = arith.constant 0 : index
    %c0_12 = arith.constant 0 : index
    %16 = vector.load %arg6[%c0_11, %c0_12] : memref<16x8xbf16, #tpu.memory_space<vmem>>, vector<16x8xbf16>
    %c0_13 = arith.constant 0 : index
    %c0_14 = arith.constant 0 : index
    %17 = vector.load %arg7[%c0_13, %c0_14] : memref<16x1xf32, #tpu.memory_space<vmem>>, vector<16x1xf32>
    %18 = arith.truncf %15 : vector<8x1024xf32> to vector<8x1024xbf16>
    %cst_15 = arith.constant dense<0.000000e+00> : vector<16x1024xf32>
    %19 = tpu.matmul %16, %18, %cst_15 {dimension_numbers = #tpu.dot_dimension_numbers<[1], [0], [0], [1], [0, 0, 1, 1], [], []>} : vector<16x8xbf16>, vector<8x1024xbf16>, vector<16x1024xf32> -> vector<16x1024xf32>
    %20 = vector.broadcast %17 : vector<16x1xf32> to vector<16x1024xf32>
    %21 = arith.addf %19, %20 : vector<16x1024xf32>
    %cst_16 = arith.constant 0.000000e+00 : f32
    %22 = vector.broadcast %cst_16 : f32 to vector<16x1024xf32>
    %23 = arith.maximumf %21, %22 : vector<16x1024xf32>
    %c0_17 = arith.constant 0 : index
    %c0_18 = arith.constant 0 : index
    %24 = vector.load %arg8[%c0_17, %c0_18] : memref<32x16xbf16, #tpu.memory_space<vmem>>, vector<32x16xbf16>
    %c0_19 = arith.constant 0 : index
    %c0_20 = arith.constant 0 : index
    %25 = vector.load %arg9[%c0_19, %c0_20] : memref<32x1xf32, #tpu.memory_space<vmem>>, vector<32x1xf32>
    %26 = arith.truncf %23 : vector<16x1024xf32> to vector<16x1024xbf16>
    %cst_21 = arith.constant dense<0.000000e+00> : vector<32x1024xf32>
    %27 = tpu.matmul %24, %26, %cst_21 {dimension_numbers = #tpu.dot_dimension_numbers<[1], [0], [0], [1], [0, 0, 1, 1], [], []>} : vector<32x16xbf16>, vector<16x1024xbf16>, vector<32x1024xf32> -> vector<32x1024xf32>
    %28 = vector.broadcast %25 : vector<32x1xf32> to vector<32x1024xf32>
    %29 = arith.addf %27, %28 : vector<32x1024xf32>
    %30 = math.tanh %29 : vector<32x1024xf32>
    %31 = tpu.transpose %30, [1, 0] : vector<32x1024xf32> -> vector<1024x32xf32>
    %c0_22 = arith.constant 0 : index
    %c0_23 = arith.constant 0 : index
    %32 = vector.load %arg10[%c0_22, %c0_23] : memref<1024x32xf32, #tpu.memory_space<vmem>>, vector<1024x32xf32>
    tpu.vector_store %arg10[%c0_22, %c0_23], %31 {strides = array<i32>} : memref<1024x32xf32, #tpu.memory_space<vmem>>, vector<1024x32xf32>,
    return
  }
  func.func @transform_0(%arg0: i32) -> (i32, i32) {
    %c0_i32 = arith.constant 0 : i32
    %c0_i32_0 = arith.constant 0 : i32
    return %arg0, %c0_i32 : i32, i32
  }
  func.func @transform_1(%arg0: i32) -> (i32, i32) {
    %c0_i32 = arith.constant 0 : i32
    %c0_i32_0 = arith.constant 0 : i32
    %c0_i32_1 = arith.constant 0 : i32
    return %c0_i32, %c0_i32_0 : i32, i32
  }
  func.func @transform_2(%arg0: i32) -> (i32, i32) {
    %c0_i32 = arith.constant 0 : i32
    %c0_i32_0 = arith.constant 0 : i32
    %c0_i32_1 = arith.constant 0 : i32
    return %c0_i32, %c0_i32_0 : i32, i32
  }
  func.func @transform_3(%arg0: i32) -> (i32, i32) {
    %c0_i32 = arith.constant 0 : i32
    %c0_i32_0 = arith.constant 0 : i32
    %c0_i32_1 = arith.constant 0 : i32
    return %c0_i32, %c0_i32_0 : i32, i32
  }
  func.func @transform_4(%arg0: i32) -> (i32, i32) {
    %c0_i32 = arith.constant 0 : i32
    %c0_i32_0 = arith.constant 0 : i32
    %c0_i32_1 = arith.constant 0 : i32
    return %c0_i32, %c0_i32_0 : i32, i32
  }
  func.func @transform_5(%arg0: i32) -> (i32, i32) {
    %c0_i32 = arith.constant 0 : i32
    %c0_i32_0 = arith.constant 0 : i32
    %c0_i32_1 = arith.constant 0 : i32
    return %c0_i32, %c0_i32_0 : i32, i32
  }
  func.func @transform_6(%arg0: i32) -> (i32, i32) {
    %c0_i32 = arith.constant 0 : i32
    %c0_i32_0 = arith.constant 0 : i32
    %c0_i32_1 = arith.constant 0 : i32
    return %c0_i32, %c0_i32_0 : i32, i32
  }
  func.func @transform_7(%arg0: i32) -> (i32, i32) {
    %c0_i32 = arith.constant 0 : i32
    %c0_i32_0 = arith.constant 0 : i32
    %c0_i32_1 = arith.constant 0 : i32
    return %c0_i32, %c0_i32_0 : i32, i32
  }
  func.func @transform_8(%arg0: i32) -> (i32, i32) {
    %c0_i32 = arith.constant 0 : i32
    %c0_i32_0 = arith.constant 0 : i32
    %c0_i32_1 = arith.constant 0 : i32
    return %c0_i32, %c0_i32_0 : i32, i32
  }
  func.func @transform_9(%arg0: i32) -> (i32, i32) {
    %c0_i32 = arith.constant 0 : i32
    %c0_i32_0 = arith.constant 0 : i32
    return %arg0, %c0_i32 : i32, i32
  }
}

</mosaic_0001>

<llo_original>
// kernel: tpu_custom_call.1
$region0: #{tpu_custom_call.1}
  #allocation0 [shape = 'u32[]', space=smem, size = 0x4, offset = 0x4, fixed_abs, tag = 'smem constant byte address 0x4 - core index']
  #allocation1 [shape = 'u32[72,128]{1,0:T(1,128)}', space=vmem, size = 0x9000, scoped, tag = 'internal scratch']
  %s0 = inlined_call_operand.vmem [shape: f32[1024,32], index: 0, kind: input, shape index: {}]
  %s1 = inlined_call_operand.vmem [shape: bf16[16,32], index: 1, kind: input, shape index: {}]
  %s2 = inlined_call_operand.vmem [shape: f32[16,1], index: 2, kind: input, shape index: {}]
  %s3 = inlined_call_operand.vmem [shape: bf16[8,16], index: 3, kind: input, shape index: {}]
  %s4 = inlined_call_operand.vmem [shape: f32[8,1], index: 4, kind: input, shape index: {}]
  %s5 = inlined_call_operand.vmem [shape: bf16[16,8], index: 5, kind: input, shape index: {}]
  %s6 = inlined_call_operand.vmem [shape: f32[16,1], index: 6, kind: input, shape index: {}]
  %s7 = inlined_call_operand.vmem [shape: bf16[32,16], index: 7, kind: input, shape index: {}]
  %s8 = inlined_call_operand.vmem [shape: f32[32,1], index: 8, kind: input, shape index: {}]
  %s9 = inlined_call_operand.vmem [shape: f32[1024,32], index: 9, kind: output, shape index: {}]
  %s10 = sld [smem:[#allocation0]]
  $region46: #{tpu_custom_call.1} parent=0
    _
  %s12 = ssub.s32 1, %s10
  %s13 = scalar_select 0, %s12, %s10
  // Predicated region
  $region2: #{tpu_custom_call.1} parent=0 // pred_check
    _
  $region3: #{tpu_custom_call.1} parent=0 // pred_check_branch
    %15 = sbr.rel (0) target = $region5
  $region4: #{tpu_custom_call.1} parent=0 // pred_region
    _
  $region5: #{tpu_custom_call.1} parent=0 // pred_fallthru
    _
  // Predicated region
  $region6: #{tpu_custom_call.1} parent=0 // pred_check
    _
  $region7: #{tpu_custom_call.1} parent=0 // pred_check_branch
    %17 = sbr.rel (0) target = $region9
  $region8: #{tpu_custom_call.1} parent=0 // pred_region
    _
  $region9: #{tpu_custom_call.1} parent=0 // pred_fallthru
    _
  // Predicated region
  $region10: #{tpu_custom_call.1} parent=0 // pred_check
    _
  $region11: #{tpu_custom_call.1} parent=0 // pred_check_branch
    %19 = sbr.rel (0) target = $region13
  $region12: #{tpu_custom_call.1} parent=0 // pred_region
    _
  $region13: #{tpu_custom_call.1} parent=0 // pred_fallthru
    _
  // Predicated region
  $region14: #{tpu_custom_call.1} parent=0 // pred_check
    _
  $region15: #{tpu_custom_call.1} parent=0 // pred_check_branch
    %21 = sbr.rel (0) target = $region17
  $region16: #{tpu_custom_call.1} parent=0 // pred_region
    _
  $region17: #{tpu_custom_call.1} parent=0 // pred_fallthru
    _
  // Predicated region
  $region18: #{tpu_custom_call.1} parent=0 // pred_check
    _
  $region19: #{tpu_custom_call.1} parent=0 // pred_check_branch
    %23 = sbr.rel (0) target = $region21
  $region20: #{tpu_custom_call.1} parent=0 // pred_region
    _
  $region21: #{tpu_custom_call.1} parent=0 // pred_fallthru
    _
  // Predicated region
  $region22: #{tpu_custom_call.1} parent=0 // pred_check
    _
  $region23: #{tpu_custom_call.1} parent=0 // pred_check_branch
    %25 = sbr.rel (0) target = $region25
  $region24: #{tpu_custom_call.1} parent=0 // pred_region
    _
  $region25: #{tpu_custom_call.1} parent=0 // pred_fallthru
    _
  // Predicated region
  $region26: #{tpu_custom_call.1} parent=0 // pred_check
    _
  $region27: #{tpu_custom_call.1} parent=0 // pred_check_branch
    %27 = sbr.rel (0) target = $region29
  $region28: #{tpu_custom_call.1} parent=0 // pred_region
    _
  $region29: #{tpu_custom_call.1} parent=0 // pred_fallthru
    _
  // Predicated region
  $region30: #{tpu_custom_call.1} parent=0 // pred_check
    _
  $region31: #{tpu_custom_call.1} parent=0 // pred_check_branch
    %29 = sbr.rel (0) target = $region33
  $region32: #{tpu_custom_call.1} parent=0 // pred_region
    _
  $region33: #{tpu_custom_call.1} parent=0 // pred_fallthru
    _
  // Predicated region
  $region34: #{tpu_custom_call.1} parent=0 // pred_check
    _
  $region35: #{tpu_custom_call.1} parent=0 // pred_check_branch
    %31 = sbr.rel (0) target = $region37
  $region36: #{tpu_custom_call.1} parent=0 // pred_region
    _
  $region37: #{tpu_custom_call.1} parent=0 // pred_fallthru
    _
  %v33 = vld [vmem:[%s0] sm:$0xff]
  %v34 = vld [vmem:[%s0 + $0x8] sm:$0xff]
  %v35 = vld [vmem:[%s0 + $0x10] sm:$0xff]
  %v36 = vld [vmem:[%s0 + $0x18] sm:$0xff]
  %v37 = vld [vmem:[%s0 + $0x20] sm:$0xff]
  %v38 = vld [vmem:[%s0 + $0x28] sm:$0xff]
  %v39 = vld [vmem:[%s0 + $0x30] sm:$0xff]
  %v40 = vld [vmem:[%s0 + $0x38] sm:$0xff]
  %v41 = vld [vmem:[%s0 + $0x40] sm:$0xff]
  %v42 = vld [vmem:[%s0 + $0x48] sm:$0xff]
  %v43 = vld [vmem:[%s0 + $0x50] sm:$0xff]
  %v44 = vld [vmem:[%s0 + $0x58] sm:$0xff]
  %v45 = vld [vmem:[%s0 + $0x60] sm:$0xff]
  %v46 = vld [vmem:[%s0 + $0x68] sm:$0xff]
  %v47 = vld [vmem:[%s0 + $0x70] sm:$0xff]
  %v48 = vld [vmem:[%s0 + $0x78] sm:$0xff]
  %v49 = vld [vmem:[%s0 + $0x80] sm:$0xff]
  %v50 = vld [vmem:[%s0 + $0x88] sm:$0xff]
  %v51 = vld [vmem:[%s0 + $0x90] sm:$0xff]
  %v52 = vld [vmem:[%s0 + $0x98] sm:$0xff]
  %v53 = vld [vmem:[%s0 + $0xa0] sm:$0xff]
  %v54 = vld [vmem:[%s0 + $0xa8] sm:$0xff]
  %v55 = vld [vmem:[%s0 + $0xb0] sm:$0xff]
  %v56 = vld [vmem:[%s0 + $0xb8] sm:$0xff]
  %v57 = vld [vmem:[%s0 + $0xc0] sm:$0xff]
  %v58 = vld [vmem:[%s0 + $0xc8] sm:$0xff]
  %v59 = vld [vmem:[%s0 + $0xd0] sm:$0xff]
  %v60 = vld [vmem:[%s0 + $0xd8] sm:$0xff]
  %v61 = vld [vmem:[%s0 + $0xe0] sm:$0xff]
  %v62 = vld [vmem:[%s0 + $0xe8] sm:$0xff]
  %v63 = vld [vmem:[%s0 + $0xf0] sm:$0xff]
  %v64 = vld [vmem:[%s0 + $0xf8] sm:$0xff]
  %v65 = vld [vmem:[%s0 + $0x100] sm:$0xff]
  %v66 = vld [vmem:[%s0 + $0x108] sm:$0xff]
  %v67 = vld [vmem:[%s0 + $0x110] sm:$0xff]
  %v68 = vld [vmem:[%s0 + $0x118] sm:$0xff]
  %v69 = vld [vmem:[%s0 + $0x120] sm:$0xff]
  %v70 = vld [vmem:[%s0 + $0x128] sm:$0xff]
  %v71 = vld [vmem:[%s0 + $0x130] sm:$0xff]
  %v72 = vld [vmem:[%s0 + $0x138] sm:$0xff]
  %v73 = vld [vmem:[%s0 + $0x140] sm:$0xff]
  %v74 = vld [vmem:[%s0 + $0x148] sm:$0xff]
  %v75 = vld [vmem:[%s0 + $0x150] sm:$0xff]
  %v76 = vld [vmem:[%s0 + $0x158] sm:$0xff]
  %v77 = vld [vmem:[%s0 + $0x160] sm:$0xff]
  %v78 = vld [vmem:[%s0 + $0x168] sm:$0xff]
  %v79 = vld [vmem:[%s0 + $0x170] sm:$0xff]
  %v80 = vld [vmem:[%s0 + $0x178] sm:$0xff]
  %v81 = vld [vmem:[%s0 + $0x180] sm:$0xff]
  %v82 = vld [vmem:[%s0 + $0x188] sm:$0xff]
  %v83 = vld [vmem:[%s0 + $0x190] sm:$0xff]
  %v84 = vld [vmem:[%s0 + $0x198] sm:$0xff]
  %v85 = vld [vmem:[%s0 + $0x1a0] sm:$0xff]
  %v86 = vld [vmem:[%s0 + $0x1a8] sm:$0xff]
  %v87 = vld [vmem:[%s0 + $0x1b0] sm:$0xff]
  %v88 = vld [vmem:[%s0 + $0x1b8] sm:$0xff]
  %v89 = vld [vmem:[%s0 + $0x1c0] sm:$0xff]
  %v90 = vld [vmem:[%s0 + $0x1c8] sm:$0xff]
  %v91 = vld [vmem:[%s0 + $0x1d0] sm:$0xff]
  %v92 = vld [vmem:[%s0 + $0x1d8] sm:$0xff]
  %v93 = vld [vmem:[%s0 + $0x1e0] sm:$0xff]
  %v94 = vld [vmem:[%s0 + $0x1e8] sm:$0xff]
  %v95 = vld [vmem:[%s0 + $0x1f0] sm:$0xff]
  %v96 = vld [vmem:[%s0 + $0x1f8] sm:$0xff]
  %v97 = vld [vmem:[%s0 + $0x200] sm:$0xff]
  %v98 = vld [vmem:[%s0 + $0x208] sm:$0xff]
  %v99 = vld [vmem:[%s0 + $0x210] sm:$0xff]
  %v100 = vld [vmem:[%s0 + $0x218] sm:$0xff]
  %v101 = vld [vmem:[%s0 + $0x220] sm:$0xff]
  %v102 = vld [vmem:[%s0 + $0x228] sm:$0xff]
  %v103 = vld [vmem:[%s0 + $0x230] sm:$0xff]
  %v104 = vld [vmem:[%s0 + $0x238] sm:$0xff]
  %v105 = vld [vmem:[%s0 + $0x240] sm:$0xff]
  %v106 = vld [vmem:[%s0 + $0x248] sm:$0xff]
  %v107 = vld [vmem:[%s0 + $0x250] sm:$0xff]
  %v108 = vld [vmem:[%s0 + $0x258] sm:$0xff]
  %v109 = vld [vmem:[%s0 + $0x260] sm:$0xff]
  %v110 = vld [vmem:[%s0 + $0x268] sm:$0xff]
  %v111 = vld [vmem:[%s0 + $0x270] sm:$0xff]
  %v112 = vld [vmem:[%s0 + $0x278] sm:$0xff]
  %v113 = vld [vmem:[%s0 + $0x280] sm:$0xff]
  %v114 = vld [vmem:[%s0 + $0x288] sm:$0xff]
  %v115 = vld [vmem:[%s0 + $0x290] sm:$0xff]
  %v116 = vld [vmem:[%s0 + $0x298] sm:$0xff]
  %v117 = vld [vmem:[%s0 + $0x2a0] sm:$0xff]
  %v118 = vld [vmem:[%s0 + $0x2a8] sm:$0xff]
  %v119 = vld [vmem:[%s0 + $0x2b0] sm:$0xff]
  %v120 = vld [vmem:[%s0 + $0x2b8] sm:$0xff]
  %v121 = vld [vmem:[%s0 + $0x2c0] sm:$0xff]
  %v122 = vld [vmem:[%s0 + $0x2c8] sm:$0xff]
  %v123 = vld [vmem:[%s0 + $0x2d0] sm:$0xff]
  %v124 = vld [vmem:[%s0 + $0x2d8] sm:$0xff]
  %v125 = vld [vmem:[%s0 + $0x2e0] sm:$0xff]
  %v126 = vld [vmem:[%s0 + $0x2e8] sm:$0xff]
  %v127 = vld [vmem:[%s0 + $0x2f0] sm:$0xff]
  %v128 = vld [vmem:[%s0 + $0x2f8] sm:$0xff]
  %v129 = vld [vmem:[%s0 + $0x300] sm:$0xff]
  %v130 = vld [vmem:[%s0 + $0x308] sm:$0xff]
  %v131 = vld [vmem:[%s0 + $0x310] sm:$0xff]
  %v132 = vld [vmem:[%s0 + $0x318] sm:$0xff]
  %v133 = vld [vmem:[%s0 + $0x320] sm:$0xff]
  %v134 = vld [vmem:[%s0 + $0x328] sm:$0xff]
  %v135 = vld [vmem:[%s0 + $0x330] sm:$0xff]
  %v136 = vld [vmem:[%s0 + $0x338] sm:$0xff]
  %v137 = vld [vmem:[%s0 + $0x340] sm:$0xff]
  %v138 = vld [vmem:[%s0 + $0x348] sm:$0xff]
  %v139 = vld [vmem:[%s0 + $0x350] sm:$0xff]
  %v140 = vld [vmem:[%s0 + $0x358] sm:$0xff]
  %v141 = vld [vmem:[%s0 + $0x360] sm:$0xff]
  %v142 = vld [vmem:[%s0 + $0x368] sm:$0xff]
  %v143 = vld [vmem:[%s0 + $0x370] sm:$0xff]
  %v144 = vld [vmem:[%s0 + $0x378] sm:$0xff]
  %v145 = vld [vmem:[%s0 + $0x380] sm:$0xff]
  %v146 = vld [vmem:[%s0 + $0x388] sm:$0xff]
  %v147 = vld [vmem:[%s0 + $0x390] sm:$0xff]
  %v148 = vld [vmem:[%s0 + $0x398] sm:$0xff]
  %v149 = vld [vmem:[%s0 + $0x3a0] sm:$0xff]
  %v150 = vld [vmem:[%s0 + $0x3a8] sm:$0xff]
  %v151 = vld [vmem:[%s0 + $0x3b0] sm:$0xff]
  %v152 = vld [vmem:[%s0 + $0x3b8] sm:$0xff]
  %v153 = vld [vmem:[%s0 + $0x3c0] sm:$0xff]
  %v154 = vld [vmem:[%s0 + $0x3c8] sm:$0xff]
  %v155 = vld [vmem:[%s0 + $0x3d0] sm:$0xff]
  %v156 = vld [vmem:[%s0 + $0x3d8] sm:$0xff]
  %v157 = vld [vmem:[%s0 + $0x3e0] sm:$0xff]
  %v158 = vld [vmem:[%s0 + $0x3e8] sm:$0xff]
  %v159 = vld [vmem:[%s0 + $0x3f0] sm:$0xff]
  %v160 = vld [vmem:[%s0 + $0x3f8] sm:$0xff]
  %161 = vxpose.xlu0.b32.start [1/16] %v33, 128
  %162 = vxpose.xlu0.b32.cont [2/16] %v34, 128
  %163 = vxpose.xlu0.b32.cont [3/16] %v35, 128
  %164 = vxpose.xlu0.b32.cont [4/16] %v36, 128
  %165 = vxpose.xlu0.b32.cont [5/16] %v37, 128
  %166 = vxpose.xlu0.b32.cont [6/16] %v38, 128
  %167 = vxpose.xlu0.b32.cont [7/16] %v39, 128
  %168 = vxpose.xlu0.b32.cont [8/16] %v40, 128
  %169 = vxpose.xlu0.b32.cont [9/16] %v41, 128
  %170 = vxpose.xlu0.b32.cont [10/16] %v42, 128
  %171 = vxpose.xlu0.b32.cont [11/16] %v43, 128
  %172 = vxpose.xlu0.b32.cont [12/16] %v44, 128
  %173 = vxpose.xlu0.b32.cont [13/16] %v45, 128
  %174 = vxpose.xlu0.b32.cont [14/16] %v46, 128
  %175 = vxpose.xlu0.b32.cont [15/16] %v47, 128
  %176 = vxpose.xlu0.b32.end [16/16] %v48, 128
  %v177 = vpop.trf.xlu0
  %v178 = vpop.trf.xlu0
  %v179 = vpop.trf.xlu0
  %v180 = vpop.trf.xlu0
  %v181 = vpop.trf.xlu0
  %v182 = vpop.trf.xlu0
  %v183 = vpop.trf.xlu0
  %v184 = vpop.trf.xlu0
  %v185 = vpop.trf.xlu0
  %v186 = vpop.trf.xlu0
  %v187 = vpop.trf.xlu0
  %v188 = vpop.trf.xlu0
  %v189 = vpop.trf.xlu0
  %v190 = vpop.trf.xlu0
  %v191 = vpop.trf.xlu0
  %v192 = vpop.trf.xlu0
  %193 = vxpose.xlu0.b32.start [1/16] %v49, 128
  %194 = vxpose.xlu0.b32.cont [2/16] %v50, 128
  %195 = vxpose.xlu0.b32.cont [3/16] %v51, 128
  %196 = vxpose.xlu0.b32.cont [4/16] %v52, 128
  %197 = vxpose.xlu0.b32.cont [5/16] %v53, 128
  %198 = vxpose.xlu0.b32.cont [6/16] %v54, 128
  %199 = vxpose.xlu0.b32.cont [7/16] %v55, 128
  %200 = vxpose.xlu0.b32.cont [8/16] %v56, 128
  %201 = vxpose.xlu0.b32.cont [9/16] %v57, 128
  %202 = vxpose.xlu0.b32.cont [10/16] %v58, 128
  %203 = vxpose.xlu0.b32.cont [11/16] %v59, 128
  %204 = vxpose.xlu0.b32.cont [12/16] %v60, 128
  %205 = vxpose.xlu0.b32.cont [13/16] %v61, 128
  %206 = vxpose.xlu0.b32.cont [14/16] %v62, 128
  %207 = vxpose.xlu0.b32.cont [15/16] %v63, 128
  %208 = vxpose.xlu0.b32.end [16/16] %v64, 128
  %v209 = vpop.trf.xlu0
  %v210 = vpop.trf.xlu0
  %v211 = vpop.trf.xlu0
  %v212 = vpop.trf.xlu0
  %v213 = vpop.trf.xlu0
  %v214 = vpop.trf.xlu0
  %v215 = vpop.trf.xlu0
  %v216 = vpop.trf.xlu0
  %v217 = vpop.trf.xlu0
  %v218 = vpop.trf.xlu0
  %v219 = vpop.trf.xlu0
  %v220 = vpop.trf.xlu0
  %v221 = vpop.trf.xlu0
  %v222 = vpop.trf.xlu0
  %v223 = vpop.trf.xlu0
  %v224 = vpop.trf.xlu0
  %225 = vxpose.xlu0.b32.start [1/16] %v65, 128
  %226 = vxpose.xlu0.b32.cont [2/16] %v66, 128
  %227 = vxpose.xlu0.b32.cont [3/16] %v67, 128
  %228 = vxpose.xlu0.b32.cont [4/16] %v68, 128
  %229 = vxpose.xlu0.b32.cont [5/16] %v69, 128
  %230 = vxpose.xlu0.b32.cont [6/16] %v70, 128
  %231 = vxpose.xlu0.b32.cont [7/16] %v71, 128
  %232 = vxpose.xlu0.b32.cont [8/16] %v72, 128
  %233 = vxpose.xlu0.b32.cont [9/16] %v73, 128
  %234 = vxpose.xlu0.b32.cont [10/16] %v74, 128
  %235 = vxpose.xlu0.b32.cont [11/16] %v75, 128
  %236 = vxpose.xlu0.b32.cont [12/16] %v76, 128
  %237 = vxpose.xlu0.b32.cont [13/16] %v77, 128
  %238 = vxpose.xlu0.b32.cont [14/16] %v78, 128
  %239 = vxpose.xlu0.b32.cont [15/16] %v79, 128
  %240 = vxpose.xlu0.b32.end [16/16] %v80, 128
  %v241 = vpop.trf.xlu0
  %v242 = vpop.trf.xlu0
  %v243 = vpop.trf.xlu0
  %v244 = vpop.trf.xlu0
  %v245 = vpop.trf.xlu0
  %v246 = vpop.trf.xlu0
  %v247 = vpop.trf.xlu0
  %v248 = vpop.trf.xlu0
  %v249 = vpop.trf.xlu0
  %v250 = vpop.trf.xlu0
  %v251 = vpop.trf.xlu0
  %v252 = vpop.trf.xlu0
  %v253 = vpop.trf.xlu0
  %v254 = vpop.trf.xlu0
  %v255 = vpop.trf.xlu0
  %v256 = vpop.trf.xlu0
  %257 = vxpose.xlu0.b32.start [1/16] %v81, 128
  %258 = vxpose.xlu0.b32.cont [2/16] %v82, 128
  %259 = vxpose.xlu0.b32.cont [3/16] %v83, 128
  %260 = vxpose.xlu0.b32.cont [4/16] %v84, 128
  %261 = vxpose.xlu0.b32.cont [5/16] %v85, 128
  %262 = vxpose.xlu0.b32.cont [6/16] %v86, 128
  %263 = vxpose.xlu0.b32.cont [7/16] %v87, 128
  %264 = vxpose.xlu0.b32.cont [8/16] %v88, 128
  %265 = vxpose.xlu0.b32.cont [9/16] %v89, 128
  %266 = vxpose.xlu0.b32.cont [10/16] %v90, 128
  %267 = vxpose.xlu0.b32.cont [11/16] %v91, 128
  %268 = vxpose.xlu0.b32.cont [12/16] %v92, 128
  %269 = vxpose.xlu0.b32.cont [13/16] %v93, 128
  %270 = vxpose.xlu0.b32.cont [14/16] %v94, 128
  %271 = vxpose.xlu0.b32.cont [15/16] %v95, 128
  %272 = vxpose.xlu0.b32.end [16/16] %v96, 128
  %v273 = vpop.trf.xlu0
  %v274 = vpop.trf.xlu0
  %v275 = vpop.trf.xlu0
  %v276 = vpop.trf.xlu0
  %v277 = vpop.trf.xlu0
  %v278 = vpop.trf.xlu0
  %v279 = vpop.trf.xlu0
  %v280 = vpop.trf.xlu0
  %v281 = vpop.trf.xlu0
  %v282 = vpop.trf.xlu0
  %v283 = vpop.trf.xlu0
  %v284 = vpop.trf.xlu0
  %v285 = vpop.trf.xlu0
  %v286 = vpop.trf.xlu0
  %v287 = vpop.trf.xlu0
  %v288 = vpop.trf.xlu0
  %289 = vxpose.xlu0.b32.start [1/16] %v97, 128
  %290 = vxpose.xlu0.b32.cont [2/16] %v98, 128
  %291 = vxpose.xlu0.b32.cont [3/16] %v99, 128
  %292 = vxpose.xlu0.b32.cont [4/16] %v100, 128
  %293 = vxpose.xlu0.b32.cont [5/16] %v101, 128
  %294 = vxpose.xlu0.b32.cont [6/16] %v102, 128
  %295 = vxpose.xlu0.b32.cont [7/16] %v103, 128
  %296 = vxpose.xlu0.b32.cont [8/16] %v104, 128
  %297 = vxpose.xlu0.b32.cont [9/16] %v105, 128
  %298 = vxpose.xlu0.b32.cont [10/16] %v106, 128
  %299 = vxpose.xlu0.b32.cont [11/16] %v107, 128
  %300 = vxpose.xlu0.b32.cont [12/16] %v108, 128
  %301 = vxpose.xlu0.b32.cont [13/16] %v109, 128
  %302 = vxpose.xlu0.b32.cont [14/16] %v110, 128
  %303 = vxpose.xlu0.b32.cont [15/16] %v111, 128
  %304 = vxpose.xlu0.b32.end [16/16] %v112, 128
  %v305 = vpop.trf.xlu0
  %v306 = vpop.trf.xlu0
  %v307 = vpop.trf.xlu0
  %v308 = vpop.trf.xlu0
  %v309 = vpop.trf.xlu0
  %v310 = vpop.trf.xlu0
  %v311 = vpop.trf.xlu0
  %v312 = vpop.trf.xlu0
  %v313 = vpop.trf.xlu0
  %v314 = vpop.trf.xlu0
  %v315 = vpop.trf.xlu0
  %v316 = vpop.trf.xlu0
  %v317 = vpop.trf.xlu0
  %v318 = vpop.trf.xlu0
  %v319 = vpop.trf.xlu0
  %v320 = vpop.trf.xlu0
  %321 = vxpose.xlu0.b32.start [1/16] %v113, 128
  %322 = vxpose.xlu0.b32.cont [2/16] %v114, 128
  %323 = vxpose.xlu0.b32.cont [3/16] %v115, 128
  %324 = vxpose.xlu0.b32.cont [4/16] %v116, 128
  %325 = vxpose.xlu0.b32.cont [5/16] %v117, 128
  %326 = vxpose.xlu0.b32.cont [6/16] %v118, 128
  %327 = vxpose.xlu0.b32.cont [7/16] %v119, 128
  %328 = vxpose.xlu0.b32.cont [8/16] %v120, 128
  %329 = vxpose.xlu0.b32.cont [9/16] %v121, 128
  %330 = vxpose.xlu0.b32.cont [10/16] %v122, 128
  %331 = vxpose.xlu0.b32.cont [11/16] %v123, 128
  %332 = vxpose.xlu0.b32.cont [12/16] %v124, 128
  %333 = vxpose.xlu0.b32.cont [13/16] %v125, 128
  %334 = vxpose.xlu0.b32.cont [14/16] %v126, 128
  %335 = vxpose.xlu0.b32.cont [15/16] %v127, 128
  %336 = vxpose.xlu0.b32.end [16/16] %v128, 128
  %v337 = vpop.trf.xlu0
  %v338 = vpop.trf.xlu0
  %v339 = vpop.trf.xlu0
  %v340 = vpop.trf.xlu0
  %v341 = vpop.trf.xlu0
  %v342 = vpop.trf.xlu0
  %v343 = vpop.trf.xlu0
  %v344 = vpop.trf.xlu0
  %v345 = vpop.trf.xlu0
  %v346 = vpop.trf.xlu0
  %v347 = vpop.trf.xlu0
  %v348 = vpop.trf.xlu0
  %v349 = vpop.trf.xlu0
  %v350 = vpop.trf.xlu0
  %v351 = vpop.trf.xlu0
  %v352 = vpop.trf.xlu0
  %353 = vxpose.xlu0.b32.start [1/16] %v129, 128
  %354 = vxpose.xlu0.b32.cont [2/16] %v130, 128
  %355 = vxpose.xlu0.b32.cont [3/16] %v131, 128
  %356 = vxpose.xlu0.b32.cont [4/16] %v132, 128
  %357 = vxpose.xlu0.b32.cont [5/16] %v133, 128
  %358 = vxpose.xlu0.b32.cont [6/16] %v134, 128
  %359 = vxpose.xlu0.b32.cont [7/16] %v135, 128
  %360 = vxpose.xlu0.b32.cont [8/16] %v136, 128
  %361 = vxpose.xlu0.b32.cont [9/16] %v137, 128
  %362 = vxpose.xlu0.b32.cont [10/16] %v138, 128
  %363 = vxpose.xlu0.b32.cont [11/16] %v139, 128
  %364 = vxpose.xlu0.b32.cont [12/16] %v140, 128
  %365 = vxpose.xlu0.b32.cont [13/16] %v141, 128
  %366 = vxpose.xlu0.b32.cont [14/16] %v142, 128
  %367 = vxpose.xlu0.b32.cont [15/16] %v143, 128
  %368 = vxpose.xlu0.b32.end [16/16] %v144, 128
  %v369 = vpop.trf.xlu0
  %v370 = vpop.trf.xlu0
  %v371 = vpop.trf.xlu0
  %v372 = vpop.trf.xlu0
  %v373 = vpop.trf.xlu0
  %v374 = vpop.trf.xlu0
  %v375 = vpop.trf.xlu0
  %v376 = vpop.trf.xlu0
  %v377 = vpop.trf.xlu0
  %v378 = vpop.trf.xlu0
  %v379 = vpop.trf.xlu0
  %v380 = vpop.trf.xlu0
  %v381 = vpop.trf.xlu0
  %v382 = vpop.trf.xlu0
  %v383 = vpop.trf.xlu0
  %v384 = vpop.trf.xlu0
  %385 = vxpose.xlu0.b32.start [1/16] %v145, 128
  %386 = vxpose.xlu0.b32.cont [2/16] %v146, 128
  %387 = vxpose.xlu0.b32.cont [3/16] %v147, 128
  %388 = vxpose.xlu0.b32.cont [4/16] %v148, 128
  %389 = vxpose.xlu0.b32.cont [5/16] %v149, 128
  %390 = vxpose.xlu0.b32.cont [6/16] %v150, 128
  %391 = vxpose.xlu0.b32.cont [7/16] %v151, 128
  %392 = vxpose.xlu0.b32.cont [8/16] %v152, 128
  %393 = vxpose.xlu0.b32.cont [9/16] %v153, 128
  %394 = vxpose.xlu0.b32.cont [10/16] %v154, 128
  %395 = vxpose.xlu0.b32.cont [11/16] %v155, 128
  %396 = vxpose.xlu0.b32.cont [12/16] %v156, 128
  %397 = vxpose.xlu0.b32.cont [13/16] %v157, 128
  %398 = vxpose.xlu0.b32.cont [14/16] %v158, 128
  %399 = vxpose.xlu0.b32.cont [15/16] %v159, 128
  %400 = vxpose.xlu0.b32.end [16/16] %v160, 128
  %v401 = vpop.trf.xlu0
  %v402 = vpop.trf.xlu0
  %v403 = vpop.trf.xlu0
  %v404 = vpop.trf.xlu0
  %v405 = vpop.trf.xlu0
  %v406 = vpop.trf.xlu0
  %v407 = vpop.trf.xlu0
  %v408 = vpop.trf.xlu0
  %v409 = vpop.trf.xlu0
  %v410 = vpop.trf.xlu0
  %v411 = vpop.trf.xlu0
  %v412 = vpop.trf.xlu0
  %v413 = vpop.trf.xlu0
  %v414 = vpop.trf.xlu0
  %v415 = vpop.trf.xlu0
  %v416 = vpop.trf.xlu0
  %v417 = vld [vmem:[%s1] sm:$0xf]
  %v418 = vld [vmem:[%s1 + $0x4] sm:$0xf]
  %v419 = vld [vmem:[%s2] sm:$0xff]
  %v420 = vld [vmem:[%s2 + $0x8] sm:$0xff]
  %v421 = vpack.c.bf16 %v178, %v177
  %v422 = vpack.c.bf16 %v210, %v209
  %v423 = vpack.c.bf16 %v242, %v241
  %v424 = vpack.c.bf16 %v274, %v273
  %v425 = vpack.c.bf16 %v306, %v305
  %v426 = vpack.c.bf16 %v338, %v337
  %v427 = vpack.c.bf16 %v370, %v369
  %v428 = vpack.c.bf16 %v402, %v401
  %v429 = vpack.c.bf16 %v180, %v179
  %v430 = vpack.c.bf16 %v212, %v211
  %v431 = vpack.c.bf16 %v244, %v243
  %v432 = vpack.c.bf16 %v276, %v275
  %v433 = vpack.c.bf16 %v308, %v307
  %v434 = vpack.c.bf16 %v340, %v339
  %v435 = vpack.c.bf16 %v372, %v371
  %v436 = vpack.c.bf16 %v404, %v403
  %438 = vset.pattern.permute.xlu0 0
  %439 = vperm.xlu0 %438, %v419
  %v440 = vpop.permute.xlu0 %439
  %443 = vset.pattern.permute.xlu0 0
  %444 = vperm.xlu0 %443, %v420
  %v445 = vpop.permute.xlu0 %444
  %v449 = vunpack.c.l.b16 %v417
  %v450 = vunpack.c.l.b16 %v418
  %v451 = vpack.c.b16 %v450, %v449
  %vm452 = vcmask 261120
  %v454 = vsel %vm452, %v451, 0
  %456 = vmatpush.bf16.msra.mxu0 0
  %457 = vmatpush.bf16.msra.mxu0 0
  %458 = vmatpush.bf16.msra.mxu0 0
  %459 = vmatpush.bf16.msra.mxu0 0
  %460 = vmatpush.bf16.msra.mxu0 0
  %461 = vmatpush.bf16.msra.mxu0 0
  %462 = vmatpush.bf16.msra.mxu0 %v429
  %463 = vmatpush.bf16.msra.mxu0 %v421
  %464 = vmatmul.bf16.gmra.mxu0 %v454
  %v465 = vpop.f32.mrf.mxu0
  %v466 = vadd.f32 %v440, %v465
  %v467 = vpop.f32.mrf.mxu0
  %v468 = vadd.f32 %v445, %v467
  %469 = vdwg.mxu0
  %470 = vmatpush.bf16.msra.mxu0 0
  %471 = vmatpush.bf16.msra.mxu0 0
  %472 = vmatpush.bf16.msra.mxu0 0
  %473 = vmatpush.bf16.msra.mxu0 0
  %474 = vmatpush.bf16.msra.mxu0 0
  %475 = vmatpush.bf16.msra.mxu0 0
  %476 = vmatpush.bf16.msra.mxu0 %v430
  %477 = vmatpush.bf16.msra.mxu0 %v422
  %478 = vmatmul.bf16.gmra.mxu0 %v454
  %v479 = vpop.f32.mrf.mxu0
  %v480 = vadd.f32 %v440, %v479
  %v481 = vpop.f32.mrf.mxu0
  %v482 = vadd.f32 %v445, %v481
  %483 = vdwg.mxu0
  %484 = vmatpush.bf16.msra.mxu0 0
  %485 = vmatpush.bf16.msra.mxu0 0
  %486 = vmatpush.bf16.msra.mxu0 0
  %487 = vmatpush.bf16.msra.mxu0 0
  %488 = vmatpush.bf16.msra.mxu0 0
  %489 = vmatpush.bf16.msra.mxu0 0
  %490 = vmatpush.bf16.msra.mxu0 %v431
  %491 = vmatpush.bf16.msra.mxu0 %v423
  %492 = vmatmul.bf16.gmra.mxu0 %v454
  %v493 = vpop.f32.mrf.mxu0
  %v494 = vadd.f32 %v440, %v493
  %v495 = vpop.f32.mrf.mxu0
  %v496 = vadd.f32 %v445, %v495
  %497 = vdwg.mxu0
  %498 = vmatpush.bf16.msra.mxu0 0
  %499 = vmatpush.bf16.msra.mxu0 0
  %500 = vmatpush.bf16.msra.mxu0 0
  %501 = vmatpush.bf16.msra.mxu0 0
  %502 = vmatpush.bf16.msra.mxu0 0
  %503 = vmatpush.bf16.msra.mxu0 0
  %504 = vmatpush.bf16.msra.mxu0 %v432
  %505 = vmatpush.bf16.msra.mxu0 %v424
  %506 = vmatmul.bf16.gmra.mxu0 %v454
  %v507 = vpop.f32.mrf.mxu0
  %v508 = vadd.f32 %v440, %v507
  %v509 = vpop.f32.mrf.mxu0
  %v510 = vadd.f32 %v445, %v509
  %511 = vdwg.mxu0
  %512 = vmatpush.bf16.msra.mxu0 0
  %513 = vmatpush.bf16.msra.mxu0 0
  %514 = vmatpush.bf16.msra.mxu0 0
  %515 = vmatpush.bf16.msra.mxu0 0
  %516 = vmatpush.bf16.msra.mxu0 0
  %517 = vmatpush.bf16.msra.mxu0 0
  %518 = vmatpush.bf16.msra.mxu0 %v433
  %519 = vmatpush.bf16.msra.mxu0 %v425
  %520 = vmatmul.bf16.gmra.mxu0 %v454
  %v521 = vpop.f32.mrf.mxu0
  %v522 = vadd.f32 %v440, %v521
  %v523 = vpop.f32.mrf.mxu0
  %v524 = vadd.f32 %v445, %v523
  %525 = vdwg.mxu0
  %526 = vmatpush.bf16.msra.mxu0 0
  %527 = vmatpush.bf16.msra.mxu0 0
  %528 = vmatpush.bf16.msra.mxu0 0
  %529 = vmatpush.bf16.msra.mxu0 0
  %530 = vmatpush.bf16.msra.mxu0 0
  %531 = vmatpush.bf16.msra.mxu0 0
  %532 = vmatpush.bf16.msra.mxu0 %v434
  %533 = vmatpush.bf16.msra.mxu0 %v426
  %534 = vmatmul.bf16.gmra.mxu0 %v454
  %v535 = vpop.f32.mrf.mxu0
  %v536 = vadd.f32 %v440, %v535
  %v537 = vpop.f32.mrf.mxu0
  %v538 = vadd.f32 %v445, %v537
  %539 = vdwg.mxu0
  %540 = vmatpush.bf16.msra.mxu0 0
  %541 = vmatpush.bf16.msra.mxu0 0
  %542 = vmatpush.bf16.msra.mxu0 0
  %543 = vmatpush.bf16.msra.mxu0 0
  %544 = vmatpush.bf16.msra.mxu0 0
  %545 = vmatpush.bf16.msra.mxu0 0
  %546 = vmatpush.bf16.msra.mxu0 %v435
  %547 = vmatpush.bf16.msra.mxu0 %v427
  %548 = vmatmul.bf16.gmra.mxu0 %v454
  %v549 = vpop.f32.mrf.mxu0
  %v550 = vadd.f32 %v440, %v549
  %v551 = vpop.f32.mrf.mxu0
  %v552 = vadd.f32 %v445, %v551
  %553 = vdwg.mxu0
  %554 = vmatpush.bf16.msra.mxu0 0
  %555 = vmatpush.bf16.msra.mxu0 0
  %556 = vmatpush.bf16.msra.mxu0 0
  %557 = vmatpush.bf16.msra.mxu0 0
  %558 = vmatpush.bf16.msra.mxu0 0
  %559 = vmatpush.bf16.msra.mxu0 0
  %560 = vmatpush.bf16.msra.mxu0 %v436
  %561 = vmatpush.bf16.msra.mxu0 %v428
  %562 = vmatmul.bf16.gmra.mxu0 %v454
  %v563 = vpop.f32.mrf.mxu0
  %v564 = vadd.f32 %v440, %v563
  %v565 = vpop.f32.mrf.mxu0
  %v566 = vadd.f32 %v445, %v565
  %567 = vdwg.mxu0
  %v568 = vmax.f32 %v466, 0.0
  %v569 = vmax.f32 %v480, 0.0
  %v570 = vmax.f32 %v494, 0.0
  %v571 = vmax.f32 %v508, 0.0
  %v572 = vmax.f32 %v522, 0.0
  %v573 = vmax.f32 %v536, 0.0
  %v574 = vmax.f32 %v550, 0.0
  %v575 = vmax.f32 %v564, 0.0
  %v576 = vmax.f32 %v468, 0.0
  %v577 = vmax.f32 %v482, 0.0
  %v578 = vmax.f32 %v496, 0.0
  %v579 = vmax.f32 %v510, 0.0
  %v580 = vmax.f32 %v524, 0.0
  %v581 = vmax.f32 %v538, 0.0
  %v582 = vmax.f32 %v552, 0.0
  %v583 = vmax.f32 %v566, 0.0
  %v584 = vld [vmem:[%s3] sm:$0xf]
  %v585 = vld [vmem:[%s4] sm:$0xff]
  %v586 = vpack.c.bf16 %v576, %v568
  %v587 = vpack.c.bf16 %v577, %v569
  %v588 = vpack.c.bf16 %v578, %v570
  %v589 = vpack.c.bf16 %v579, %v571
  %v590 = vpack.c.bf16 %v580, %v572
  %v591 = vpack.c.bf16 %v581, %v573
  %v592 = vpack.c.bf16 %v582, %v574
  %v593 = vpack.c.bf16 %v583, %v575
  %595 = vset.pattern.permute.xlu0 0
  %596 = vperm.xlu0 %595, %v585
  %v597 = vpop.permute.xlu0 %596
  %vm599 = vcmask 130048
  %v601 = vsel %vm599, %v584, 0
  %603 = vmatpush.bf16.msra.mxu0 0
  %604 = vmatpush.bf16.msra.mxu0 0
  %605 = vmatpush.bf16.msra.mxu0 0
  %606 = vmatpush.bf16.msra.mxu0 0
  %607 = vmatpush.bf16.msra.mxu0 0
  %608 = vmatpush.bf16.msra.mxu0 0
  %609 = vmatpush.bf16.msra.mxu0 0
  %610 = vmatpush.bf16.msra.mxu0 %v586
  %611 = vmatmul.bf16.gmra.mxu0 %v601
  %v612 = vpop.f32.mrf.mxu0
  %v613 = vadd.f32 %v597, %v612
  %v614 = vpop.f32.mrf.mxu0
  %615 = vdwg.mxu0
  %616 = vmatpush.bf16.msra.mxu0 0
  %617 = vmatpush.bf16.msra.mxu0 0
  %618 = vmatpush.bf16.msra.mxu0 0
  %619 = vmatpush.bf16.msra.mxu0 0
  %620 = vmatpush.bf16.msra.mxu0 0
  %621 = vmatpush.bf16.msra.mxu0 0
  %622 = vmatpush.bf16.msra.mxu0 0
  %623 = vmatpush.bf16.msra.mxu0 %v587
  %624 = vmatmul.bf16.gmra.mxu0 %v601
  %v625 = vpop.f32.mrf.mxu0
  %v626 = vadd.f32 %v597, %v625
  %v627 = vpop.f32.mrf.mxu0
  %628 = vdwg.mxu0
  %629 = vmatpush.bf16.msra.mxu0 0
  %630 = vmatpush.bf16.msra.mxu0 0
  %631 = vmatpush.bf16.msra.mxu0 0
  %632 = vmatpush.bf16.msra.mxu0 0
  %633 = vmatpush.bf16.msra.mxu0 0
  %634 = vmatpush.bf16.msra.mxu0 0
  %635 = vmatpush.bf16.msra.mxu0 0
  %636 = vmatpush.bf16.msra.mxu0 %v588
  %637 = vmatmul.bf16.gmra.mxu0 %v601
  %v638 = vpop.f32.mrf.mxu0
  %v639 = vadd.f32 %v597, %v638
  %v640 = vpop.f32.mrf.mxu0
  %641 = vdwg.mxu0
  %642 = vmatpush.bf16.msra.mxu0 0
  %643 = vmatpush.bf16.msra.mxu0 0
  %644 = vmatpush.bf16.msra.mxu0 0
  %645 = vmatpush.bf16.msra.mxu0 0
  %646 = vmatpush.bf16.msra.mxu0 0
  %647 = vmatpush.bf16.msra.mxu0 0
  %648 = vmatpush.bf16.msra.mxu0 0
  %649 = vmatpush.bf16.msra.mxu0 %v589
  %650 = vmatmul.bf16.gmra.mxu0 %v601
  %v651 = vpop.f32.mrf.mxu0
  %v652 = vadd.f32 %v597, %v651
  %v653 = vpop.f32.mrf.mxu0
  %654 = vdwg.mxu0
  %655 = vmatpush.bf16.msra.mxu0 0
  %656 = vmatpush.bf16.msra.mxu0 0
  %657 = vmatpush.bf16.msra.mxu0 0
  %658 = vmatpush.bf16.msra.mxu0 0
  %659 = vmatpush.bf16.msra.mxu0 0
  %660 = vmatpush.bf16.msra.mxu0 0
  %661 = vmatpush.bf16.msra.mxu0 0
  %662 = vmatpush.bf16.msra.mxu0 %v590
  %663 = vmatmul.bf16.gmra.mxu0 %v601
  %v664 = vpop.f32.mrf.mxu0
  %v665 = vadd.f32 %v597, %v664
  %v666 = vpop.f32.mrf.mxu0
  %667 = vdwg.mxu0
  %668 = vmatpush.bf16.msra.mxu0 0
  %669 = vmatpush.bf16.msra.mxu0 0
  %670 = vmatpush.bf16.msra.mxu0 0
  %671 = vmatpush.bf16.msra.mxu0 0
  %672 = vmatpush.bf16.msra.mxu0 0
  %673 = vmatpush.bf16.msra.mxu0 0
  %674 = vmatpush.bf16.msra.mxu0 0
  %675 = vmatpush.bf16.msra.mxu0 %v591
  %676 = vmatmul.bf16.gmra.mxu0 %v601
  %v677 = vpop.f32.mrf.mxu0
  %v678 = vadd.f32 %v597, %v677
  %v679 = vpop.f32.mrf.mxu0
  %680 = vdwg.mxu0
  %681 = vmatpush.bf16.msra.mxu0 0
  %682 = vmatpush.bf16.msra.mxu0 0
  %683 = vmatpush.bf16.msra.mxu0 0
  %684 = vmatpush.bf16.msra.mxu0 0
  %685 = vmatpush.bf16.msra.mxu0 0
  %686 = vmatpush.bf16.msra.mxu0 0
  %687 = vmatpush.bf16.msra.mxu0 0
  %688 = vmatpush.bf16.msra.mxu0 %v592
  %689 = vmatmul.bf16.gmra.mxu0 %v601
  %v690 = vpop.f32.mrf.mxu0
  %v691 = vadd.f32 %v597, %v690
  %v692 = vpop.f32.mrf.mxu0
  %693 = vdwg.mxu0
  %694 = vmatpush.bf16.msra.mxu0 0
  %695 = vmatpush.bf16.msra.mxu0 0
  %696 = vmatpush.bf16.msra.mxu0 0
  %697 = vmatpush.bf16.msra.mxu0 0
  %698 = vmatpush.bf16.msra.mxu0 0
  %699 = vmatpush.bf16.msra.mxu0 0
  %700 = vmatpush.bf16.msra.mxu0 0
  %701 = vmatpush.bf16.msra.mxu0 %v593
  %702 = vmatmul.bf16.gmra.mxu0 %v601
  %v703 = vpop.f32.mrf.mxu0
  %v704 = vadd.f32 %v597, %v703
  %v705 = vpop.f32.mrf.mxu0
  %706 = vdwg.mxu0
  %v707 = vld [vmem:[%s5] sm:$0xf]
  %v708 = vld [vmem:[%s5 + $0x4] sm:$0xf]
  %v709 = vld [vmem:[%s6] sm:$0xff]
  %v710 = vld [vmem:[%s6 + $0x8] sm:$0xff]
  %v711 = vpack.c.bf16 %v613, %v613
  %v712 = vpack.c.bf16 %v626, %v626
  %v713 = vpack.c.bf16 %v639, %v639
  %v714 = vpack.c.bf16 %v652, %v652
  %v715 = vpack.c.bf16 %v665, %v665
  %v716 = vpack.c.bf16 %v678, %v678
  %v717 = vpack.c.bf16 %v691, %v691
  %v718 = vpack.c.bf16 %v704, %v704
  %720 = vset.pattern.permute.xlu0 0
  %721 = vperm.xlu0 %720, %v709
  %v722 = vpop.permute.xlu0 %721
  %725 = vset.pattern.permute.xlu0 0
  %726 = vperm.xlu0 %725, %v710
  %v727 = vpop.permute.xlu0 %726
  %v731 = vunpack.c.l.b16 %v707
  %v732 = vunpack.c.l.b16 %v708
  %v733 = vpack.c.b16 %v732, %v731
  %vm734 = vcmask 64512
  %v736 = vsel %vm734, %v733, 0
  %vm738 = vcmask 1043456
  %v740 = vsel %vm738, %v711, 0
  %v743 = vsel %vm738, %v712, 0
  %v746 = vsel %vm738, %v713, 0
  %v749 = vsel %vm738, %v714, 0
  %v752 = vsel %vm738, %v715, 0
  %v755 = vsel %vm738, %v716, 0
  %v758 = vsel %vm738, %v717, 0
  %v761 = vsel %vm738, %v718, 0
  %763 = vmatpush.bf16.msra.mxu0 0
  %764 = vmatpush.bf16.msra.mxu0 0
  %765 = vmatpush.bf16.msra.mxu0 0
  %766 = vmatpush.bf16.msra.mxu0 0
  %767 = vmatpush.bf16.msra.mxu0 0
  %768 = vmatpush.bf16.msra.mxu0 0
  %769 = vmatpush.bf16.msra.mxu0 0
  %770 = vmatpush.bf16.msra.mxu0 %v740
  %771 = vmatmul.bf16.gmra.mxu0 %v736
  %v772 = vpop.f32.mrf.mxu0
  %v773 = vadd.f32 %v722, %v772
  %v774 = vpop.f32.mrf.mxu0
  %v775 = vadd.f32 %v727, %v774
  %776 = vdwg.mxu0
  %777 = vmatpush.bf16.msra.mxu0 0
  %778 = vmatpush.bf16.msra.mxu0 0
  %779 = vmatpush.bf16.msra.mxu0 0
  %780 = vmatpush.bf16.msra.mxu0 0
  %781 = vmatpush.bf16.msra.mxu0 0
  %782 = vmatpush.bf16.msra.mxu0 0
  %783 = vmatpush.bf16.msra.mxu0 0
  %784 = vmatpush.bf16.msra.mxu0 %v743
  %785 = vmatmul.bf16.gmra.mxu0 %v736
  %v786 = vpop.f32.mrf.mxu0
  %v787 = vadd.f32 %v722, %v786
  %v788 = vpop.f32.mrf.mxu0
  %v789 = vadd.f32 %v727, %v788
  %790 = vdwg.mxu0
  %791 = vmatpush.bf16.msra.mxu0 0
  %792 = vmatpush.bf16.msra.mxu0 0
  %793 = vmatpush.bf16.msra.mxu0 0
  %794 = vmatpush.bf16.msra.mxu0 0
  %795 = vmatpush.bf16.msra.mxu0 0
  %796 = vmatpush.bf16.msra.mxu0 0
  %797 = vmatpush.bf16.msra.mxu0 0
  %798 = vmatpush.bf16.msra.mxu0 %v746
  %799 = vmatmul.bf16.gmra.mxu0 %v736
  %v800 = vpop.f32.mrf.mxu0
  %v801 = vadd.f32 %v722, %v800
  %v802 = vpop.f32.mrf.mxu0
  %v803 = vadd.f32 %v727, %v802
  %804 = vdwg.mxu0
  %805 = vmatpush.bf16.msra.mxu0 0
  %806 = vmatpush.bf16.msra.mxu0 0
  %807 = vmatpush.bf16.msra.mxu0 0
  %808 = vmatpush.bf16.msra.mxu0 0
  %809 = vmatpush.bf16.msra.mxu0 0
  %810 = vmatpush.bf16.msra.mxu0 0
  %811 = vmatpush.bf16.msra.mxu0 0
  %812 = vmatpush.bf16.msra.mxu0 %v749
  %813 = vmatmul.bf16.gmra.mxu0 %v736
  %v814 = vpop.f32.mrf.mxu0
  %v815 = vadd.f32 %v722, %v814
  %v816 = vpop.f32.mrf.mxu0
  %v817 = vadd.f32 %v727, %v816
  %818 = vdwg.mxu0
  %819 = vmatpush.bf16.msra.mxu0 0
  %820 = vmatpush.bf16.msra.mxu0 0
  %821 = vmatpush.bf16.msra.mxu0 0
  %822 = vmatpush.bf16.msra.mxu0 0
  %823 = vmatpush.bf16.msra.mxu0 0
  %824 = vmatpush.bf16.msra.mxu0 0
  %825 = vmatpush.bf16.msra.mxu0 0
  %826 = vmatpush.bf16.msra.mxu0 %v752
  %827 = vmatmul.bf16.gmra.mxu0 %v736
  %v828 = vpop.f32.mrf.mxu0
  %v829 = vadd.f32 %v722, %v828
  %v830 = vpop.f32.mrf.mxu0
  %v831 = vadd.f32 %v727, %v830
  %832 = vdwg.mxu0
  %833 = vmatpush.bf16.msra.mxu0 0
  %834 = vmatpush.bf16.msra.mxu0 0
  %835 = vmatpush.bf16.msra.mxu0 0
  %836 = vmatpush.bf16.msra.mxu0 0
  %837 = vmatpush.bf16.msra.mxu0 0
  %838 = vmatpush.bf16.msra.mxu0 0
  %839 = vmatpush.bf16.msra.mxu0 0
  %840 = vmatpush.bf16.msra.mxu0 %v755
  %841 = vmatmul.bf16.gmra.mxu0 %v736
  %v842 = vpop.f32.mrf.mxu0
  %v843 = vadd.f32 %v722, %v842
  %v844 = vpop.f32.mrf.mxu0
  %v845 = vadd.f32 %v727, %v844
  %846 = vdwg.mxu0
  %847 = vmatpush.bf16.msra.mxu0 0
  %848 = vmatpush.bf16.msra.mxu0 0
  %849 = vmatpush.bf16.msra.mxu0 0
  %850 = vmatpush.bf16.msra.mxu0 0
  %851 = vmatpush.bf16.msra.mxu0 0
  %852 = vmatpush.bf16.msra.mxu0 0
  %853 = vmatpush.bf16.msra.mxu0 0
  %854 = vmatpush.bf16.msra.mxu0 %v758
  %855 = vmatmul.bf16.gmra.mxu0 %v736
  %v856 = vpop.f32.mrf.mxu0
  %v857 = vadd.f32 %v722, %v856
  %v858 = vpop.f32.mrf.mxu0
  %v859 = vadd.f32 %v727, %v858
  %860 = vdwg.mxu0
  %861 = vmatpush.bf16.msra.mxu0 0
  %862 = vmatpush.bf16.msra.mxu0 0
  %863 = vmatpush.bf16.msra.mxu0 0
  %864 = vmatpush.bf16.msra.mxu0 0
  %865 = vmatpush.bf16.msra.mxu0 0
  %866 = vmatpush.bf16.msra.mxu0 0
  %867 = vmatpush.bf16.msra.mxu0 0
  %868 = vmatpush.bf16.msra.mxu0 %v761
  %869 = vmatmul.bf16.gmra.mxu0 %v736
  %v870 = vpop.f32.mrf.mxu0
  %v871 = vadd.f32 %v722, %v870
  %v872 = vpop.f32.mrf.mxu0
  %v873 = vadd.f32 %v727, %v872
  %874 = vdwg.mxu0
  %v875 = vmax.f32 %v773, 0.0
  %v876 = vmax.f32 %v787, 0.0
  %v877 = vmax.f32 %v801, 0.0
  %v878 = vmax.f32 %v815, 0.0
  %v879 = vmax.f32 %v829, 0.0
  %v880 = vmax.f32 %v843, 0.0
  %v881 = vmax.f32 %v857, 0.0
  %v882 = vmax.f32 %v871, 0.0
  %v883 = vmax.f32 %v775, 0.0
  %v884 = vmax.f32 %v789, 0.0
  %v885 = vmax.f32 %v803, 0.0
  %v886 = vmax.f32 %v817, 0.0
  %v887 = vmax.f32 %v831, 0.0
  %v888 = vmax.f32 %v845, 0.0
  %v889 = vmax.f32 %v859, 0.0
  %v890 = vmax.f32 %v873, 0.0
  %v891 = vld [vmem:[%s7] sm:$0xf]
  %v892 = vld [vmem:[%s7 + $0x4] sm:$0xf]
  %v893 = vld [vmem:[%s7 + $0x8] sm:$0xf]
  %v894 = vld [vmem:[%s7 + $0xc] sm:$0xf]
  %v895 = vld [vmem:[%s8] sm:$0xff]
  %v896 = vld [vmem:[%s8 + $0x8] sm:$0xff]
  %v897 = vld [vmem:[%s8 + $0x10] sm:$0xff]
  %v898 = vld [vmem:[%s8 + $0x18] sm:$0xff]
  %v899 = vpack.c.bf16 %v883, %v875
  %v900 = vpack.c.bf16 %v884, %v876
  %v901 = vpack.c.bf16 %v885, %v877
  %v902 = vpack.c.bf16 %v886, %v878
  %v903 = vpack.c.bf16 %v887, %v879
  %v904 = vpack.c.bf16 %v888, %v880
  %v905 = vpack.c.bf16 %v889, %v881
  %v906 = vpack.c.bf16 %v890, %v882
  %908 = vset.pattern.permute.xlu0 0
  %909 = vperm.xlu0 %908, %v895
  %v910 = vpop.permute.xlu0 %909
  %913 = vset.pattern.permute.xlu0 0
  %914 = vperm.xlu0 %913, %v896
  %v915 = vpop.permute.xlu0 %914
  %918 = vset.pattern.permute.xlu0 0
  %919 = vperm.xlu0 %918, %v897
  %v920 = vpop.permute.xlu0 %919
  %923 = vset.pattern.permute.xlu0 0
  %924 = vperm.xlu0 %923, %v898
  %v925 = vpop.permute.xlu0 %924
  %v931 = vunpack.c.l.b16 %v891
  %v932 = vunpack.c.l.b16 %v892
  %v933 = vunpack.c.l.b16 %v893
  %v934 = vunpack.c.l.b16 %v894
  %v935 = vpack.c.b16 %v932, %v931
  %v936 = vpack.c.b16 %v934, %v933
  %v938 = vsel %vm599, %v935, 0
  %v941 = vsel %vm599, %v936, 0
  %943 = vmatpush.bf16.msra.mxu0 0
  %944 = vmatpush.bf16.msra.mxu0 0
  %945 = vmatpush.bf16.msra.mxu0 0
  %946 = vmatpush.bf16.msra.mxu0 0
  %947 = vmatpush.bf16.msra.mxu0 0
  %948 = vmatpush.bf16.msra.mxu0 0
  %949 = vmatpush.bf16.msra.mxu0 0
  %950 = vmatpush.bf16.msra.mxu0 %v899
  %951 = vmatmul.bf16.gmra.mxu0 %v938
  %v952 = vpop.f32.mrf.mxu0
  %v953 = vadd.f32 %v910, %v952
  %v954 = vpop.f32.mrf.mxu0
  %v955 = vadd.f32 %v915, %v954
  %956 = vmatmul.bf16.gmra.mxu0 %v941
  %v957 = vpop.f32.mrf.mxu0
  %v958 = vadd.f32 %v920, %v957
  %v959 = vpop.f32.mrf.mxu0
  %v960 = vadd.f32 %v925, %v959
  %961 = vdwg.mxu0
  %962 = vmatpush.bf16.msra.mxu0 0
  %963 = vmatpush.bf16.msra.mxu0 0
  %964 = vmatpush.bf16.msra.mxu0 0
  %965 = vmatpush.bf16.msra.mxu0 0
  %966 = vmatpush.bf16.msra.mxu0 0
  %967 = vmatpush.bf16.msra.mxu0 0
  %968 = vmatpush.bf16.msra.mxu0 0
  %969 = vmatpush.bf16.msra.mxu0 %v900
  %970 = vmatmul.bf16.gmra.mxu0 %v938
  %v971 = vpop.f32.mrf.mxu0
  %v972 = vadd.f32 %v910, %v971
  %v973 = vpop.f32.mrf.mxu0
  %v974 = vadd.f32 %v915, %v973
  %975 = vmatmul.bf16.gmra.mxu0 %v941
  %v976 = vpop.f32.mrf.mxu0
  %v977 = vadd.f32 %v920, %v976
  %v978 = vpop.f32.mrf.mxu0
  %v979 = vadd.f32 %v925, %v978
  %980 = vdwg.mxu0
  %981 = vmatpush.bf16.msra.mxu0 0
  %982 = vmatpush.bf16.msra.mxu0 0
  %983 = vmatpush.bf16.msra.mxu0 0
  %984 = vmatpush.bf16.msra.mxu0 0
  %985 = vmatpush.bf16.msra.mxu0 0
  %986 = vmatpush.bf16.msra.mxu0 0
  %987 = vmatpush.bf16.msra.mxu0 0
  %988 = vmatpush.bf16.msra.mxu0 %v901
  %989 = vmatmul.bf16.gmra.mxu0 %v938
  %v990 = vpop.f32.mrf.mxu0
  %v991 = vadd.f32 %v910, %v990
  %v992 = vpop.f32.mrf.mxu0
  %v993 = vadd.f32 %v915, %v992
  %994 = vmatmul.bf16.gmra.mxu0 %v941
  %v995 = vpop.f32.mrf.mxu0
  %v996 = vadd.f32 %v920, %v995
  %v997 = vpop.f32.mrf.mxu0
  %v998 = vadd.f32 %v925, %v997
  %999 = vdwg.mxu0
  %1000 = vmatpush.bf16.msra.mxu0 0
  %1001 = vmatpush.bf16.msra.mxu0 0
  %1002 = vmatpush.bf16.msra.mxu0 0
  %1003 = vmatpush.bf16.msra.mxu0 0
  %1004 = vmatpush.bf16.msra.mxu0 0
  %1005 = vmatpush.bf16.msra.mxu0 0
  %1006 = vmatpush.bf16.msra.mxu0 0
  %1007 = vmatpush.bf16.msra.mxu0 %v902
  %1008 = vmatmul.bf16.gmra.mxu0 %v938
  %v1009 = vpop.f32.mrf.mxu0
  %v1010 = vadd.f32 %v910, %v1009
  %v1011 = vpop.f32.mrf.mxu0
  %v1012 = vadd.f32 %v915, %v1011
  %1013 = vmatmul.bf16.gmra.mxu0 %v941
  %v1014 = vpop.f32.mrf.mxu0
  %v1015 = vadd.f32 %v920, %v1014
  %v1016 = vpop.f32.mrf.mxu0
  %v1017 = vadd.f32 %v925, %v1016
  %1018 = vdwg.mxu0
  %1019 = vmatpush.bf16.msra.mxu0 0
  %1020 = vmatpush.bf16.msra.mxu0 0
  %1021 = vmatpush.bf16.msra.mxu0 0
  %1022 = vmatpush.bf16.msra.mxu0 0
  %1023 = vmatpush.bf16.msra.mxu0 0
  %1024 = vmatpush.bf16.msra.mxu0 0
  %1025 = vmatpush.bf16.msra.mxu0 0
  %1026 = vmatpush.bf16.msra.mxu0 %v903
  %1027 = vmatmul.bf16.gmra.mxu0 %v938
  %v1028 = vpop.f32.mrf.mxu0
  %v1029 = vadd.f32 %v910, %v1028
  %v1030 = vpop.f32.mrf.mxu0
  %v1031 = vadd.f32 %v915, %v1030
  %1032 = vmatmul.bf16.gmra.mxu0 %v941
  %v1033 = vpop.f32.mrf.mxu0
  %v1034 = vadd.f32 %v920, %v1033
  %v1035 = vpop.f32.mrf.mxu0
  %v1036 = vadd.f32 %v925, %v1035
  %1037 = vdwg.mxu0
  %1038 = vmatpush.bf16.msra.mxu0 0
  %1039 = vmatpush.bf16.msra.mxu0 0
  %1040 = vmatpush.bf16.msra.mxu0 0
  %1041 = vmatpush.bf16.msra.mxu0 0
  %1042 = vmatpush.bf16.msra.mxu0 0
  %1043 = vmatpush.bf16.msra.mxu0 0
  %1044 = vmatpush.bf16.msra.mxu0 0
  %1045 = vmatpush.bf16.msra.mxu0 %v904
  %1046 = vmatmul.bf16.gmra.mxu0 %v938
  %v1047 = vpop.f32.mrf.mxu0
  %v1048 = vadd.f32 %v910, %v1047
  %v1049 = vpop.f32.mrf.mxu0
  %v1050 = vadd.f32 %v915, %v1049
  %1051 = vmatmul.bf16.gmra.mxu0 %v941
  %v1052 = vpop.f32.mrf.mxu0
  %v1053 = vadd.f32 %v920, %v1052
  %v1054 = vpop.f32.mrf.mxu0
  %v1055 = vadd.f32 %v925, %v1054
  %1056 = vdwg.mxu0
  %1057 = vmatpush.bf16.msra.mxu0 0
  %1058 = vmatpush.bf16.msra.mxu0 0
  %1059 = vmatpush.bf16.msra.mxu0 0
  %1060 = vmatpush.bf16.msra.mxu0 0
  %1061 = vmatpush.bf16.msra.mxu0 0
  %1062 = vmatpush.bf16.msra.mxu0 0
  %1063 = vmatpush.bf16.msra.mxu0 0
  %1064 = vmatpush.bf16.msra.mxu0 %v905
  %1065 = vmatmul.bf16.gmra.mxu0 %v938
  %v1066 = vpop.f32.mrf.mxu0
  %v1067 = vadd.f32 %v910, %v1066
  %v1068 = vpop.f32.mrf.mxu0
  %v1069 = vadd.f32 %v915, %v1068
  %1070 = vmatmul.bf16.gmra.mxu0 %v941
  %v1071 = vpop.f32.mrf.mxu0
  %v1072 = vadd.f32 %v920, %v1071
  %v1073 = vpop.f32.mrf.mxu0
  %v1074 = vadd.f32 %v925, %v1073
  %1075 = vdwg.mxu0
  %1076 = vmatpush.bf16.msra.mxu0 0
  %1077 = vmatpush.bf16.msra.mxu0 0
  %1078 = vmatpush.bf16.msra.mxu0 0
  %1079 = vmatpush.bf16.msra.mxu0 0
  %1080 = vmatpush.bf16.msra.mxu0 0
  %1081 = vmatpush.bf16.msra.mxu0 0
  %1082 = vmatpush.bf16.msra.mxu0 0
  %1083 = vmatpush.bf16.msra.mxu0 %v906
  %1084 = vmatmul.bf16.gmra.mxu0 %v938
  %v1085 = vpop.f32.mrf.mxu0
  %v1086 = vadd.f32 %v910, %v1085
  %v1087 = vpop.f32.mrf.mxu0
  %v1088 = vadd.f32 %v915, %v1087
  %1089 = vmatmul.bf16.gmra.mxu0 %v941
  %v1090 = vpop.f32.mrf.mxu0
  %v1091 = vadd.f32 %v920, %v1090
  %v1092 = vpop.f32.mrf.mxu0
  %v1093 = vadd.f32 %v925, %v1092
  %1094 = vdwg.mxu0
  %v1095 = vtanh.pop %v953
  %v1096 = vtanh.pop %v972
  %v1097 = vtanh.pop %v991
  %v1098 = vtanh.pop %v1010
  %v1099 = vtanh.pop %v1029
  %v1100 = vtanh.pop %v1048
  %v1101 = vtanh.pop %v1067
  %v1102 = vtanh.pop %v1086
  %v1103 = vtanh.pop %v955
  %v1104 = vtanh.pop %v974
  %v1105 = vtanh.pop %v993
  %v1106 = vtanh.pop %v1012
  %v1107 = vtanh.pop %v1031
  %v1108 = vtanh.pop %v1050
  %v1109 = vtanh.pop %v1069
  %v1110 = vtanh.pop %v1088
  %v1111 = vtanh.pop %v958
  %v1112 = vtanh.pop %v977
  %v1113 = vtanh.pop %v996
  %v1114 = vtanh.pop %v1015
  %v1115 = vtanh.pop %v1034
  %v1116 = vtanh.pop %v1053
  %v1117 = vtanh.pop %v1072
  %v1118 = vtanh.pop %v1091
  %v1119 = vtanh.pop %v960
  %v1120 = vtanh.pop %v979
  %v1121 = vtanh.pop %v998
  %v1122 = vtanh.pop %v1017
  %v1123 = vtanh.pop %v1036
  %v1124 = vtanh.pop %v1055
  %v1125 = vtanh.pop %v1074
  %v1126 = vtanh.pop %v1093
  %1127 = vxpose.xlu0.b32.start [1/16] %v1095, 128
  %1128 = vxpose.xlu0.b32.cont [2/16] %v1103, 128
  %1129 = vxpose.xlu0.b32.cont [3/16] %v1111, 128
  %1130 = vxpose.xlu0.b32.cont [4/16] %v1119, 128
  %1131 = vxpose.xlu0.b32.cont [5/16] 0.0, 128
  %1132 = vxpose.xlu0.b32.cont [6/16] 0.0, 128
  %1133 = vxpose.xlu0.b32.cont [7/16] 0.0, 128
  %1134 = vxpose.xlu0.b32.cont [8/16] 0.0, 128
  %1135 = vxpose.xlu0.b32.cont [9/16] 0.0, 128
  %1136 = vxpose.xlu0.b32.cont [10/16] 0.0, 128
  %1137 = vxpose.xlu0.b32.cont [11/16] 0.0, 128
  %1138 = vxpose.xlu0.b32.cont [12/16] 0.0, 128
  %1139 = vxpose.xlu0.b32.cont [13/16] 0.0, 128
  %1140 = vxpose.xlu0.b32.cont [14/16] 0.0, 128
  %1141 = vxpose.xlu0.b32.cont [15/16] 0.0, 128
  %1142 = vxpose.xlu0.b32.end [16/16] 0.0, 128
  %v1143 = vpop.trf.xlu0
  %v1144 = vpop.trf.xlu0
  %v1145 = vpop.trf.xlu0
  %v1146 = vpop.trf.xlu0
  %v1147 = vpop.trf.xlu0
  %v1148 = vpop.trf.xlu0
  %v1149 = vpop.trf.xlu0
  %v1150 = vpop.trf.xlu0
  %v1151 = vpop.trf.xlu0
  %v1152 = vpop.trf.xlu0
  %v1153 = vpop.trf.xlu0
  %v1154 = vpop.trf.xlu0
  %v1155 = vpop.trf.xlu0
  %v1156 = vpop.trf.xlu0
  %v1157 = vpop.trf.xlu0
  %v1158 = vpop.trf.xlu0
  %1159 = vxpose.xlu0.b32.start [1/16] %v1096, 128
  %1160 = vxpose.xlu0.b32.cont [2/16] %v1104, 128
  %1161 = vxpose.xlu0.b32.cont [3/16] %v1112, 128
  %1162 = vxpose.xlu0.b32.cont [4/16] %v1120, 128
  %1163 = vxpose.xlu0.b32.cont [5/16] 0.0, 128
  %1164 = vxpose.xlu0.b32.cont [6/16] 0.0, 128
  %1165 = vxpose.xlu0.b32.cont [7/16] 0.0, 128
  %1166 = vxpose.xlu0.b32.cont [8/16] 0.0, 128
  %1167 = vxpose.xlu0.b32.cont [9/16] 0.0, 128
  %1168 = vxpose.xlu0.b32.cont [10/16] 0.0, 128
  %1169 = vxpose.xlu0.b32.cont [11/16] 0.0, 128
  %1170 = vxpose.xlu0.b32.cont [12/16] 0.0, 128
  %1171 = vxpose.xlu0.b32.cont [13/16] 0.0, 128
  %1172 = vxpose.xlu0.b32.cont [14/16] 0.0, 128
  %1173 = vxpose.xlu0.b32.cont [15/16] 0.0, 128
  %1174 = vxpose.xlu0.b32.end [16/16] 0.0, 128
  %v1175 = vpop.trf.xlu0
  %v1176 = vpop.trf.xlu0
  %v1177 = vpop.trf.xlu0
  %v1178 = vpop.trf.xlu0
  %v1179 = vpop.trf.xlu0
  %v1180 = vpop.trf.xlu0
  %v1181 = vpop.trf.xlu0
  %v1182 = vpop.trf.xlu0
  %v1183 = vpop.trf.xlu0
  %v1184 = vpop.trf.xlu0
  %v1185 = vpop.trf.xlu0
  %v1186 = vpop.trf.xlu0
  %v1187 = vpop.trf.xlu0
  %v1188 = vpop.trf.xlu0
  %v1189 = vpop.trf.xlu0
  %v1190 = vpop.trf.xlu0
  %1191 = vxpose.xlu0.b32.start [1/16] %v1097, 128
  %1192 = vxpose.xlu0.b32.cont [2/16] %v1105, 128
  %1193 = vxpose.xlu0.b32.cont [3/16] %v1113, 128
  %1194 = vxpose.xlu0.b32.cont [4/16] %v1121, 128
  %1195 = vxpose.xlu0.b32.cont [5/16] 0.0, 128
  %1196 = vxpose.xlu0.b32.cont [6/16] 0.0, 128
  %1197 = vxpose.xlu0.b32.cont [7/16] 0.0, 128
  %1198 = vxpose.xlu0.b32.cont [8/16] 0.0, 128
  %1199 = vxpose.xlu0.b32.cont [9/16] 0.0, 128
  %1200 = vxpose.xlu0.b32.cont [10/16] 0.0, 128
  %1201 = vxpose.xlu0.b32.cont [11/16] 0.0, 128
  %1202 = vxpose.xlu0.b32.cont [12/16] 0.0, 128
  %1203 = vxpose.xlu0.b32.cont [13/16] 0.0, 128
  %1204 = vxpose.xlu0.b32.cont [14/16] 0.0, 128
  %1205 = vxpose.xlu0.b32.cont [15/16] 0.0, 128
  %1206 = vxpose.xlu0.b32.end [16/16] 0.0, 128
  %v1207 = vpop.trf.xlu0
  %v1208 = vpop.trf.xlu0
  %v1209 = vpop.trf.xlu0
  %v1210 = vpop.trf.xlu0
  %v1211 = vpop.trf.xlu0
  %v1212 = vpop.trf.xlu0
  %v1213 = vpop.trf.xlu0
  %v1214 = vpop.trf.xlu0
  %v1215 = vpop.trf.xlu0
  %v1216 = vpop.trf.xlu0
  %v1217 = vpop.trf.xlu0
  %v1218 = vpop.trf.xlu0
  %v1219 = vpop.trf.xlu0
  %v1220 = vpop.trf.xlu0
  %v1221 = vpop.trf.xlu0
  %v1222 = vpop.trf.xlu0
  %1223 = vxpose.xlu0.b32.start [1/16] %v1098, 128
  %1224 = vxpose.xlu0.b32.cont [2/16] %v1106, 128
  %1225 = vxpose.xlu0.b32.cont [3/16] %v1114, 128
  %1226 = vxpose.xlu0.b32.cont [4/16] %v1122, 128
  %1227 = vxpose.xlu0.b32.cont [5/16] 0.0, 128
  %1228 = vxpose.xlu0.b32.cont [6/16] 0.0, 128
  %1229 = vxpose.xlu0.b32.cont [7/16] 0.0, 128
  %1230 = vxpose.xlu0.b32.cont [8/16] 0.0, 128
  %1231 = vxpose.xlu0.b32.cont [9/16] 0.0, 128
  %1232 = vxpose.xlu0.b32.cont [10/16] 0.0, 128
  %1233 = vxpose.xlu0.b32.cont [11/16] 0.0, 128
  %1234 = vxpose.xlu0.b32.cont [12/16] 0.0, 128
  %1235 = vxpose.xlu0.b32.cont [13/16] 0.0, 128
  %1236 = vxpose.xlu0.b32.cont [14/16] 0.0, 128
  %1237 = vxpose.xlu0.b32.cont [15/16] 0.0, 128
  %1238 = vxpose.xlu0.b32.end [16/16] 0.0, 128
  %v1239 = vpop.trf.xlu0
  %v1240 = vpop.trf.xlu0
  %v1241 = vpop.trf.xlu0
  %v1242 = vpop.trf.xlu0
  %v1243 = vpop.trf.xlu0
  %v1244 = vpop.trf.xlu0
  %v1245 = vpop.trf.xlu0
  %v1246 = vpop.trf.xlu0
  %v1247 = vpop.trf.xlu0
  %v1248 = vpop.trf.xlu0
  %v1249 = vpop.trf.xlu0
  %v1250 = vpop.trf.xlu0
  %v1251 = vpop.trf.xlu0
  %v1252 = vpop.trf.xlu0
  %v1253 = vpop.trf.xlu0
  %v1254 = vpop.trf.xlu0
  %1255 = vxpose.xlu0.b32.start [1/16] %v1099, 128
  %1256 = vxpose.xlu0.b32.cont [2/16] %v1107, 128
  %1257 = vxpose.xlu0.b32.cont [3/16] %v1115, 128
  %1258 = vxpose.xlu0.b32.cont [4/16] %v1123, 128
  %1259 = vxpose.xlu0.b32.cont [5/16] 0.0, 128
  %1260 = vxpose.xlu0.b32.cont [6/16] 0.0, 128
  %1261 = vxpose.xlu0.b32.cont [7/16] 0.0, 128
  %1262 = vxpose.xlu0.b32.cont [8/16] 0.0, 128
  %1263 = vxpose.xlu0.b32.cont [9/16] 0.0, 128
  %1264 = vxpose.xlu0.b32.cont [10/16] 0.0, 128
  %1265 = vxpose.xlu0.b32.cont [11/16] 0.0, 128
  %1266 = vxpose.xlu0.b32.cont [12/16] 0.0, 128
  %1267 = vxpose.xlu0.b32.cont [13/16] 0.0, 128
  %1268 = vxpose.xlu0.b32.cont [14/16] 0.0, 128
  %1269 = vxpose.xlu0.b32.cont [15/16] 0.0, 128
  %1270 = vxpose.xlu0.b32.end [16/16] 0.0, 128
  %v1271 = vpop.trf.xlu0
  %v1272 = vpop.trf.xlu0
  %v1273 = vpop.trf.xlu0
  %v1274 = vpop.trf.xlu0
  %v1275 = vpop.trf.xlu0
  %v1276 = vpop.trf.xlu0
  %v1277 = vpop.trf.xlu0
  %v1278 = vpop.trf.xlu0
  %v1279 = vpop.trf.xlu0
  %v1280 = vpop.trf.xlu0
  %v1281 = vpop.trf.xlu0
  %v1282 = vpop.trf.xlu0
  %v1283 = vpop.trf.xlu0
  %v1284 = vpop.trf.xlu0
  %v1285 = vpop.trf.xlu0
  %v1286 = vpop.trf.xlu0
  %1287 = vxpose.xlu0.b32.start [1/16] %v1100, 128
  %1288 = vxpose.xlu0.b32.cont [2/16] %v1108, 128
  %1289 = vxpose.xlu0.b32.cont [3/16] %v1116, 128
  %1290 = vxpose.xlu0.b32.cont [4/16] %v1124, 128
  %1291 = vxpose.xlu0.b32.cont [5/16] 0.0, 128
  %1292 = vxpose.xlu0.b32.cont [6/16] 0.0, 128
  %1293 = vxpose.xlu0.b32.cont [7/16] 0.0, 128
  %1294 = vxpose.xlu0.b32.cont [8/16] 0.0, 128
  %1295 = vxpose.xlu0.b32.cont [9/16] 0.0, 128
  %1296 = vxpose.xlu0.b32.cont [10/16] 0.0, 128
  %1297 = vxpose.xlu0.b32.cont [11/16] 0.0, 128
  %1298 = vxpose.xlu0.b32.cont [12/16] 0.0, 128
  %1299 = vxpose.xlu0.b32.cont [13/16] 0.0, 128
  %1300 = vxpose.xlu0.b32.cont [14/16] 0.0, 128
  %1301 = vxpose.xlu0.b32.cont [15/16] 0.0, 128
  %1302 = vxpose.xlu0.b32.end [16/16] 0.0, 128
  %v1303 = vpop.trf.xlu0
  %v1304 = vpop.trf.xlu0
  %v1305 = vpop.trf.xlu0
  %v1306 = vpop.trf.xlu0
  %v1307 = vpop.trf.xlu0
  %v1308 = vpop.trf.xlu0
  %v1309 = vpop.trf.xlu0
  %v1310 = vpop.trf.xlu0
  %v1311 = vpop.trf.xlu0
  %v1312 = vpop.trf.xlu0
  %v1313 = vpop.trf.xlu0
  %v1314 = vpop.trf.xlu0
  %v1315 = vpop.trf.xlu0
  %v1316 = vpop.trf.xlu0
  %v1317 = vpop.trf.xlu0
  %v1318 = vpop.trf.xlu0
  %1319 = vxpose.xlu0.b32.start [1/16] %v1101, 128
  %1320 = vxpose.xlu0.b32.cont [2/16] %v1109, 128
  %1321 = vxpose.xlu0.b32.cont [3/16] %v1117, 128
  %1322 = vxpose.xlu0.b32.cont [4/16] %v1125, 128
  %1323 = vxpose.xlu0.b32.cont [5/16] 0.0, 128
  %1324 = vxpose.xlu0.b32.cont [6/16] 0.0, 128
  %1325 = vxpose.xlu0.b32.cont [7/16] 0.0, 128
  %1326 = vxpose.xlu0.b32.cont [8/16] 0.0, 128
  %1327 = vxpose.xlu0.b32.cont [9/16] 0.0, 128
  %1328 = vxpose.xlu0.b32.cont [10/16] 0.0, 128
  %1329 = vxpose.xlu0.b32.cont [11/16] 0.0, 128
  %1330 = vxpose.xlu0.b32.cont [12/16] 0.0, 128
  %1331 = vxpose.xlu0.b32.cont [13/16] 0.0, 128
  %1332 = vxpose.xlu0.b32.cont [14/16] 0.0, 128
  %1333 = vxpose.xlu0.b32.cont [15/16] 0.0, 128
  %1334 = vxpose.xlu0.b32.end [16/16] 0.0, 128
  %v1335 = vpop.trf.xlu0
  %v1336 = vpop.trf.xlu0
  %v1337 = vpop.trf.xlu0
  %v1338 = vpop.trf.xlu0
  %v1339 = vpop.trf.xlu0
  %v1340 = vpop.trf.xlu0
  %v1341 = vpop.trf.xlu0
  %v1342 = vpop.trf.xlu0
  %v1343 = vpop.trf.xlu0
  %v1344 = vpop.trf.xlu0
  %v1345 = vpop.trf.xlu0
  %v1346 = vpop.trf.xlu0
  %v1347 = vpop.trf.xlu0
  %v1348 = vpop.trf.xlu0
  %v1349 = vpop.trf.xlu0
  %v1350 = vpop.trf.xlu0
  %1351 = vxpose.xlu0.b32.start [1/16] %v1102, 128
  %1352 = vxpose.xlu0.b32.cont [2/16] %v1110, 128
  %1353 = vxpose.xlu0.b32.cont [3/16] %v1118, 128
  %1354 = vxpose.xlu0.b32.cont [4/16] %v1126, 128
  %1355 = vxpose.xlu0.b32.cont [5/16] 0.0, 128
  %1356 = vxpose.xlu0.b32.cont [6/16] 0.0, 128
  %1357 = vxpose.xlu0.b32.cont [7/16] 0.0, 128
  %1358 = vxpose.xlu0.b32.cont [8/16] 0.0, 128
  %1359 = vxpose.xlu0.b32.cont [9/16] 0.0, 128
  %1360 = vxpose.xlu0.b32.cont [10/16] 0.0, 128
  %1361 = vxpose.xlu0.b32.cont [11/16] 0.0, 128
  %1362 = vxpose.xlu0.b32.cont [12/16] 0.0, 128
  %1363 = vxpose.xlu0.b32.cont [13/16] 0.0, 128
  %1364 = vxpose.xlu0.b32.cont [14/16] 0.0, 128
  %1365 = vxpose.xlu0.b32.cont [15/16] 0.0, 128
  %1366 = vxpose.xlu0.b32.end [16/16] 0.0, 128
  %v1367 = vpop.trf.xlu0
  %v1368 = vpop.trf.xlu0
  %v1369 = vpop.trf.xlu0
  %v1370 = vpop.trf.xlu0
  %v1371 = vpop.trf.xlu0
  %v1372 = vpop.trf.xlu0
  %v1373 = vpop.trf.xlu0
  %v1374 = vpop.trf.xlu0
  %v1375 = vpop.trf.xlu0
  %v1376 = vpop.trf.xlu0
  %v1377 = vpop.trf.xlu0
  %v1378 = vpop.trf.xlu0
  %v1379 = vpop.trf.xlu0
  %v1380 = vpop.trf.xlu0
  %v1381 = vpop.trf.xlu0
  %v1382 = vpop.trf.xlu0
  %1383 = vst.msk [vmem:[%s9] sm:$0xff] %vm452, %v1143
  %1384 = vst.msk [vmem:[%s9 + $0x8] sm:$0xff] %vm452, %v1144
  %1385 = vst.msk [vmem:[%s9 + $0x10] sm:$0xff] %vm452, %v1145
  %1386 = vst.msk [vmem:[%s9 + $0x18] sm:$0xff] %vm452, %v1146
  %1387 = vst.msk [vmem:[%s9 + $0x20] sm:$0xff] %vm452, %v1147
  %1388 = vst.msk [vmem:[%s9 + $0x28] sm:$0xff] %vm452, %v1148
  %1389 = vst.msk [vmem:[%s9 + $0x30] sm:$0xff] %vm452, %v1149
  %1390 = vst.msk [vmem:[%s9 + $0x38] sm:$0xff] %vm452, %v1150
  %1391 = vst.msk [vmem:[%s9 + $0x40] sm:$0xff] %vm452, %v1151
  %1392 = vst.msk [vmem:[%s9 + $0x48] sm:$0xff] %vm452, %v1152
  %1393 = vst.msk [vmem:[%s9 + $0x50] sm:$0xff] %vm452, %v1153
  %1394 = vst.msk [vmem:[%s9 + $0x58] sm:$0xff] %vm452, %v1154
  %1395 = vst.msk [vmem:[%s9 + $0x60] sm:$0xff] %vm452, %v1155
  %1396 = vst.msk [vmem:[%s9 + $0x68] sm:$0xff] %vm452, %v1156
  %1397 = vst.msk [vmem:[%s9 + $0x70] sm:$0xff] %vm452, %v1157
  %1398 = vst.msk [vmem:[%s9 + $0x78] sm:$0xff] %vm452, %v1158
  %1399 = vst.msk [vmem:[%s9 + $0x80] sm:$0xff] %vm452, %v1175
  %1400 = vst.msk [vmem:[%s9 + $0x88] sm:$0xff] %vm452, %v1176
  %1401 = vst.msk [vmem:[%s9 + $0x90] sm:$0xff] %vm452, %v1177
  %1402 = vst.msk [vmem:[%s9 + $0x98] sm:$0xff] %vm452, %v1178
  %1403 = vst.msk [vmem:[%s9 + $0xa0] sm:$0xff] %vm452, %v1179
  %1404 = vst.msk [vmem:[%s9 + $0xa8] sm:$0xff] %vm452, %v1180
  %1405 = vst.msk [vmem:[%s9 + $0xb0] sm:$0xff] %vm452, %v1181
  %1406 = vst.msk [vmem:[%s9 + $0xb8] sm:$0xff] %vm452, %v1182
  %1407 = vst.msk [vmem:[%s9 + $0xc0] sm:$0xff] %vm452, %v1183
  %1408 = vst.msk [vmem:[%s9 + $0xc8] sm:$0xff] %vm452, %v1184
  %1409 = vst.msk [vmem:[%s9 + $0xd0] sm:$0xff] %vm452, %v1185
  %1410 = vst.msk [vmem:[%s9 + $0xd8] sm:$0xff] %vm452, %v1186
  %1411 = vst.msk [vmem:[%s9 + $0xe0] sm:$0xff] %vm452, %v1187
  %1412 = vst.msk [vmem:[%s9 + $0xe8] sm:$0xff] %vm452, %v1188
  %1413 = vst.msk [vmem:[%s9 + $0xf0] sm:$0xff] %vm452, %v1189
  %1414 = vst.msk [vmem:[%s9 + $0xf8] sm:$0xff] %vm452, %v1190
  %1415 = vst.msk [vmem:[%s9 + $0x100] sm:$0xff] %vm452, %v1207
  %1416 = vst.msk [vmem:[%s9 + $0x108] sm:$0xff] %vm452, %v1208
  %1417 = vst.msk [vmem:[%s9 + $0x110] sm:$0xff] %vm452, %v1209
  %1418 = vst.msk [vmem:[%s9 + $0x118] sm:$0xff] %vm452, %v1210
  %1419 = vst.msk [vmem:[%s9 + $0x120] sm:$0xff] %vm452, %v1211
  %1420 = vst.msk [vmem:[%s9 + $0x128] sm:$0xff] %vm452, %v1212
  %1421 = vst.msk [vmem:[%s9 + $0x130] sm:$0xff] %vm452, %v1213
  %1422 = vst.msk [vmem:[%s9 + $0x138] sm:$0xff] %vm452, %v1214
  %1423 = vst.msk [vmem:[%s9 + $0x140] sm:$0xff] %vm452, %v1215
  %1424 = vst.msk [vmem:[%s9 + $0x148] sm:$0xff] %vm452, %v1216
  %1425 = vst.msk [vmem:[%s9 + $0x150] sm:$0xff] %vm452, %v1217
  %1426 = vst.msk [vmem:[%s9 + $0x158] sm:$0xff] %vm452, %v1218
  %1427 = vst.msk [vmem:[%s9 + $0x160] sm:$0xff] %vm452, %v1219
  %1428 = vst.msk [vmem:[%s9 + $0x168] sm:$0xff] %vm452, %v1220
  %1429 = vst.msk [vmem:[%s9 + $0x170] sm:$0xff] %vm452, %v1221
  %1430 = vst.msk [vmem:[%s9 + $0x178] sm:$0xff] %vm452, %v1222
  %1431 = vst.msk [vmem:[%s9 + $0x180] sm:$0xff] %vm452, %v1239
  %1432 = vst.msk [vmem:[%s9 + $0x188] sm:$0xff] %vm452, %v1240
  %1433 = vst.msk [vmem:[%s9 + $0x190] sm:$0xff] %vm452, %v1241
  %1434 = vst.msk [vmem:[%s9 + $0x198] sm:$0xff] %vm452, %v1242
  %1435 = vst.msk [vmem:[%s9 + $0x1a0] sm:$0xff] %vm452, %v1243
  %1436 = vst.msk [vmem:[%s9 + $0x1a8] sm:$0xff] %vm452, %v1244
  %1437 = vst.msk [vmem:[%s9 + $0x1b0] sm:$0xff] %vm452, %v1245
  %1438 = vst.msk [vmem:[%s9 + $0x1b8] sm:$0xff] %vm452, %v1246
  %1439 = vst.msk [vmem:[%s9 + $0x1c0] sm:$0xff] %vm452, %v1247
  %1440 = vst.msk [vmem:[%s9 + $0x1c8] sm:$0xff] %vm452, %v1248
  %1441 = vst.msk [vmem:[%s9 + $0x1d0] sm:$0xff] %vm452, %v1249
  %1442 = vst.msk [vmem:[%s9 + $0x1d8] sm:$0xff] %vm452, %v1250
  %1443 = vst.msk [vmem:[%s9 + $0x1e0] sm:$0xff] %vm452, %v1251
  %1444 = vst.msk [vmem:[%s9 + $0x1e8] sm:$0xff] %vm452, %v1252
  %1445 = vst.msk [vmem:[%s9 + $0x1f0] sm:$0xff] %vm452, %v1253
  %1446 = vst.msk [vmem:[%s9 + $0x1f8] sm:$0xff] %vm452, %v1254
  %1447 = vst.msk [vmem:[%s9 + $0x200] sm:$0xff] %vm452, %v1271
  %1448 = vst.msk [vmem:[%s9 + $0x208] sm:$0xff] %vm452, %v1272
  %1449 = vst.msk [vmem:[%s9 + $0x210] sm:$0xff] %vm452, %v1273
  %1450 = vst.msk [vmem:[%s9 + $0x218] sm:$0xff] %vm452, %v1274
  %1451 = vst.msk [vmem:[%s9 + $0x220] sm:$0xff] %vm452, %v1275
  %1452 = vst.msk [vmem:[%s9 + $0x228] sm:$0xff] %vm452, %v1276
  %1453 = vst.msk [vmem:[%s9 + $0x230] sm:$0xff] %vm452, %v1277
  %1454 = vst.msk [vmem:[%s9 + $0x238] sm:$0xff] %vm452, %v1278
  %1455 = vst.msk [vmem:[%s9 + $0x240] sm:$0xff] %vm452, %v1279
  %1456 = vst.msk [vmem:[%s9 + $0x248] sm:$0xff] %vm452, %v1280
  %1457 = vst.msk [vmem:[%s9 + $0x250] sm:$0xff] %vm452, %v1281
  %1458 = vst.msk [vmem:[%s9 + $0x258] sm:$0xff] %vm452, %v1282
  %1459 = vst.msk [vmem:[%s9 + $0x260] sm:$0xff] %vm452, %v1283
  %1460 = vst.msk [vmem:[%s9 + $0x268] sm:$0xff] %vm452, %v1284
  %1461 = vst.msk [vmem:[%s9 + $0x270] sm:$0xff] %vm452, %v1285
  %1462 = vst.msk [vmem:[%s9 + $0x278] sm:$0xff] %vm452, %v1286
  %1463 = vst.msk [vmem:[%s9 + $0x280] sm:$0xff] %vm452, %v1303
  %1464 = vst.msk [vmem:[%s9 + $0x288] sm:$0xff] %vm452, %v1304
  %1465 = vst.msk [vmem:[%s9 + $0x290] sm:$0xff] %vm452, %v1305
  %1466 = vst.msk [vmem:[%s9 + $0x298] sm:$0xff] %vm452, %v1306
  %1467 = vst.msk [vmem:[%s9 + $0x2a0] sm:$0xff] %vm452, %v1307
  %1468 = vst.msk [vmem:[%s9 + $0x2a8] sm:$0xff] %vm452, %v1308
  %1469 = vst.msk [vmem:[%s9 + $0x2b0] sm:$0xff] %vm452, %v1309
  %1470 = vst.msk [vmem:[%s9 + $0x2b8] sm:$0xff] %vm452, %v1310
  %1471 = vst.msk [vmem:[%s9 + $0x2c0] sm:$0xff] %vm452, %v1311
  %1472 = vst.msk [vmem:[%s9 + $0x2c8] sm:$0xff] %vm452, %v1312
  %1473 = vst.msk [vmem:[%s9 + $0x2d0] sm:$0xff] %vm452, %v1313
  %1474 = vst.msk [vmem:[%s9 + $0x2d8] sm:$0xff] %vm452, %v1314
  %1475 = vst.msk [vmem:[%s9 + $0x2e0] sm:$0xff] %vm452, %v1315
  %1476 = vst.msk [vmem:[%s9 + $0x2e8] sm:$0xff] %vm452, %v1316
  %1477 = vst.msk [vmem:[%s9 + $0x2f0] sm:$0xff] %vm452, %v1317
  %1478 = vst.msk [vmem:[%s9 + $0x2f8] sm:$0xff] %vm452, %v1318
  %1479 = vst.msk [vmem:[%s9 + $0x300] sm:$0xff] %vm452, %v1335
  %1480 = vst.msk [vmem:[%s9 + $0x308] sm:$0xff] %vm452, %v1336
  %1481 = vst.msk [vmem:[%s9 + $0x310] sm:$0xff] %vm452, %v1337
  %1482 = vst.msk [vmem:[%s9 + $0x318] sm:$0xff] %vm452, %v1338
  %1483 = vst.msk [vmem:[%s9 + $0x320] sm:$0xff] %vm452, %v1339
  %1484 = vst.msk [vmem:[%s9 + $0x328] sm:$0xff] %vm452, %v1340
  %1485 = vst.msk [vmem:[%s9 + $0x330] sm:$0xff] %vm452, %v1341
  %1486 = vst.msk [vmem:[%s9 + $0x338] sm:$0xff] %vm452, %v1342
  %1487 = vst.msk [vmem:[%s9 + $0x340] sm:$0xff] %vm452, %v1343
  %1488 = vst.msk [vmem:[%s9 + $0x348] sm:$0xff] %vm452, %v1344
  %1489 = vst.msk [vmem:[%s9 + $0x350] sm:$0xff] %vm452, %v1345
  %1490 = vst.msk [vmem:[%s9 + $0x358] sm:$0xff] %vm452, %v1346
  %1491 = vst.msk [vmem:[%s9 + $0x360] sm:$0xff] %vm452, %v1347
  %1492 = vst.msk [vmem:[%s9 + $0x368] sm:$0xff] %vm452, %v1348
  %1493 = vst.msk [vmem:[%s9 + $0x370] sm:$0xff] %vm452, %v1349
  %1494 = vst.msk [vmem:[%s9 + $0x378] sm:$0xff] %vm452, %v1350
  %1495 = vst.msk [vmem:[%s9 + $0x380] sm:$0xff] %vm452, %v1367
  %1496 = vst.msk [vmem:[%s9 + $0x388] sm:$0xff] %vm452, %v1368
  %1497 = vst.msk [vmem:[%s9 + $0x390] sm:$0xff] %vm452, %v1369
  %1498 = vst.msk [vmem:[%s9 + $0x398] sm:$0xff] %vm452, %v1370
  %1499 = vst.msk [vmem:[%s9 + $0x3a0] sm:$0xff] %vm452, %v1371
  %1500 = vst.msk [vmem:[%s9 + $0x3a8] sm:$0xff] %vm452, %v1372
  %1501 = vst.msk [vmem:[%s9 + $0x3b0] sm:$0xff] %vm452, %v1373
  %1502 = vst.msk [vmem:[%s9 + $0x3b8] sm:$0xff] %vm452, %v1374
  %1503 = vst.msk [vmem:[%s9 + $0x3c0] sm:$0xff] %vm452, %v1375
  %1504 = vst.msk [vmem:[%s9 + $0x3c8] sm:$0xff] %vm452, %v1376
  %1505 = vst.msk [vmem:[%s9 + $0x3d0] sm:$0xff] %vm452, %v1377
  %1506 = vst.msk [vmem:[%s9 + $0x3d8] sm:$0xff] %vm452, %v1378
  %1507 = vst.msk [vmem:[%s9 + $0x3e0] sm:$0xff] %vm452, %v1379
  %1508 = vst.msk [vmem:[%s9 + $0x3e8] sm:$0xff] %vm452, %v1380
  %1509 = vst.msk [vmem:[%s9 + $0x3f0] sm:$0xff] %vm452, %v1381
  %1510 = vst.msk [vmem:[%s9 + $0x3f8] sm:$0xff] %vm452, %v1382
  // Predicated region
  $region38: #{tpu_custom_call.1} parent=0 // pred_check
    _
  $region39: #{tpu_custom_call.1} parent=0 // pred_check_branch
    %1512 = sbr.rel (0) target = $region41
  $region40: #{tpu_custom_call.1} parent=0 // pred_region
    _
  $region41: #{tpu_custom_call.1} parent=0 // pred_fallthru
    _
  // Predicated region
  $region42: #{tpu_custom_call.1} parent=0 // pred_check
    _
  $region43: #{tpu_custom_call.1} parent=0 // pred_check_branch
    %1514 = sbr.rel (0) target = $region45
  $region44: #{tpu_custom_call.1} parent=0 // pred_region
    _
  $region45: #{tpu_custom_call.1} parent=0 // pred_fallthru
    _

</llo_original>
